<compile_context>
chip_gen: v7x
topology: tpu7x:2x2x1
jax: 0.10.0
libtpu: 0.0.40
codegen_flags: <defaults>
</compile_context>

<pallas_src>
import functools

import jax
import jax.numpy as jnp
from jax.experimental import pallas as pl
from jax.experimental.pallas import tpu as pltpu


def _vq_kernel(xt_ref, e_ref, et_ref, e2_ref, zt_ref, sse_ref):
    """Quantize one (D, tn) column tile of the transposed latents.

    xt_ref:  (D, tn)  latents tile, transposed (columns = flattened pixels)
    e_ref:   (K, D)   full codebook                  (resident)
    et_ref:  (D, K)   full codebook, pre-transposed  (resident)
    e2_ref:  (K, 1)   precomputed ||e_k||^2          (resident, hoisted)
    zt_ref:  (D, tn)  quantized output tile (lane-dense stores)
    sse_ref: (8, 128) per-tile partial sums of squared error
    """
    x_t = xt_ref[...].astype(jnp.float32)                        # (D, tn)
    e = e_ref[...].astype(jnp.float32)                           # (K, D)
    e_t = et_ref[...].astype(jnp.float32)                        # (D, K)
    e2 = e2_ref[...].astype(jnp.float32)                         # (K, 1)
    K = e.shape[0]

    # score[k, n] = ||e_k||^2 - 2 <e_k, x_n>.  The ||x_n||^2 term of the true
    # squared distance is constant along k, so it cannot change the argmin.
    ex = jnp.dot(e, x_t, preferred_element_type=jnp.float32)     # (K, tn) MXU
    score = e2 - 2.0 * ex                                        # (K, tn) VPU

    # argmin over the codebook (sublane) axis, first occurrence on ties —
    # same tie-break as torch.argmin / jnp.argmin.
    min_val = jnp.min(score, axis=0, keepdims=True)              # (1, tn) XLU
    iota_k = jax.lax.broadcasted_iota(jnp.int32, score.shape, 0) # (K, tn)
    idx = jnp.min(jnp.where(score == min_val, iota_k, K),
                  axis=0, keepdims=True)                         # (1, tn)

    # Gather the selected embeddings on the MXU: z^T = E^T @ onehot^T, already
    # in the lane-dense (D, tn) layout required for the store.
    onehot_t = (iota_k == idx).astype(jnp.float32)               # (K, tn)
    z_t = jnp.dot(e_t, onehot_t, preferred_element_type=jnp.float32)

    zt_ref[...] = z_t.astype(zt_ref.dtype)                       # dense vst

    # SSE partials: fold (D, tn) squared errors down to a single (8, 128)
    # vreg with pure VPU adds over full, aligned vreg slices.  The one
    # remaining cross-lane reduce is done once in the wrapper.
    diff = x_t - z_t
    d2 = diff * diff                                             # (D, tn)
    part = d2[0:8, :]
    for r in range(8, d2.shape[0], 8):                           # sublane fold
        part = part + d2[r:r + 8, :]
    acc = part[:, 0:128]
    for c in range(128, part.shape[1], 128):                     # lane fold
        acc = acc + part[:, c:c + 128]
    sse_ref[...] = acc


def _pick_tile(N, K, D):
    """Largest lane-aligned column tile that divides N and keeps the per-step
    live set (score/onehot/iota ~ 3*K*tn*4B plus x/z tiles, double-buffered)
    comfortably below the scoped-VMEM limit on every TPU generation."""
    budget = 8 * 1024 * 1024  # bytes, conservative
    tn = min(N, 4096)
    while tn > 128 and (N % tn != 0 or (3 * K + 6 * D) * tn * 4 > budget):
        tn //= 2
    return tn


@functools.partial(jax.jit, static_argnames=("commitment_cost", "tn"))
def vector_quantizer(latents, codebook, commitment_cost=0.25, tn=None):
    """latents: (B, C, H, W) NCHW; codebook: (K, D) with D == C."""
    B, C, H, W = latents.shape
    K, D = codebook.shape
    assert C == D, "channel dim must equal embedding_dim"
    assert D % 8 == 0, "embedding_dim must be a multiple of 8"
    N = B * H * W
    assert N % 128 == 0, "B*H*W must be a multiple of 128"
    if tn is None:
        tn = _pick_tile(N, K, D)
    assert N % tn == 0 and tn % 128 == 0, "bad column tile"
    num_tiles = N // tn

    # NCHW -> (D, N) transposed-flat layout; column n matches row n of the
    # PyTorch module's flattened (B, H, W) ordering.
    x_t = jnp.transpose(latents.reshape(B, C, H * W), (1, 0, 2)).reshape(C, N)

    cb32 = codebook.astype(jnp.float32)
    e_t = jnp.transpose(cb32)                            # (D, K)
    e2 = jnp.sum(cb32 * cb32, axis=1, keepdims=True)     # (K, 1), hoisted

    z_t, sse_parts = pl.pallas_call(
        _vq_kernel,
        out_shape=(
            jax.ShapeDtypeStruct((D, N), latents.dtype),
            jax.ShapeDtypeStruct((8 * num_tiles, 128), jnp.float32),
        ),
        grid_spec=pltpu.PrefetchScalarGridSpec(
            num_scalar_prefetch=0,
            grid=(num_tiles,),
            in_specs=[
                pl.BlockSpec((D, tn), lambda i: (0, i)),   # latents tile
                pl.BlockSpec((K, D), lambda i: (0, 0)),    # codebook (resident)
                pl.BlockSpec((D, K), lambda i: (0, 0)),    # codebook^T (resident)
                pl.BlockSpec((K, 1), lambda i: (0, 0)),    # ||e||^2 (resident)
            ],
            out_specs=(
                pl.BlockSpec((D, tn), lambda i: (0, i)),   # quantized tile
                pl.BlockSpec((8, 128), lambda i: (i, 0)),  # SSE partials
            ),
        ),
        compiler_params=pltpu.CompilerParams(
            dimension_semantics=("parallel",),   # no cross-step carry
            vmem_limit_bytes=32 * 1024 * 1024,
        ),
    )(x_t, cb32, e_t, e2)

    mse = jnp.sum(sse_parts) / jnp.float32(N * D)
    # codebook_loss and commitment_loss have identical forward values
    # (detach only changes gradients).
    vq_loss = mse + commitment_cost * mse

    # Straight-through estimator: forward value equals the quantized latents.
    # TODO(synk): gradients of the straight-through / detached losses are not
    # implemented (forward-only kernel).
    quant_nchw = jnp.transpose(z_t.reshape(C, B, H, W), (1, 0, 2, 3))
    return quant_nchw, vq_loss


def _reference(latents, codebook, commitment_cost=0.25):
    """Pure-JAX reference mirroring the PyTorch forward."""
    B, C, H, W = latents.shape
    x = jnp.transpose(latents, (0, 2, 3, 1)).reshape(-1, C)
    dist = (jnp.sum(x ** 2, axis=1, keepdims=True)
            + jnp.sum(codebook ** 2, axis=1)
            - 2.0 * x @ codebook.T)
    idx = jnp.argmin(dist, axis=1)
    z = codebook[idx].reshape(B, H, W, C)
    mse = jnp.mean((jnp.transpose(latents, (0, 2, 3, 1)) - z) ** 2)
    vq_loss = mse + commitment_cost * mse
    return jnp.transpose(z, (0, 3, 1, 2)), vq_loss


if __name__ == "__main__":
    num_embeddings = 128     # K
    embedding_dim = 32       # D == channels
    commitment_cost = 0.25
    B, H, W = 2, 16, 16

    key = jax.random.PRNGKey(0)
    k_lat, k_emb = jax.random.split(key)

    # nn.Embedding weight ~ U(-1/K, 1/K), deterministic in-script init.
    codebook = jax.random.uniform(
        k_emb, (num_embeddings, embedding_dim), jnp.float32,
        minval=-1.0 / num_embeddings, maxval=1.0 / num_embeddings)

    latents = jax.random.normal(k_lat, (B, embedding_dim, H, W), jnp.float32)

    quant, vq_loss = vector_quantizer(latents, codebook, commitment_cost)
    quant = jax.block_until_ready(quant)
    vq_loss = jax.block_until_ready(vq_loss)

    # Sanity check against the pure-JAX reference.
    ref_q, ref_loss = _reference(latents, codebook, commitment_cost)
    assert quant.shape == latents.shape
    assert jnp.allclose(quant, ref_q, atol=1e-5, rtol=1e-5)
    assert jnp.allclose(vq_loss, ref_loss, atol=1e-6, rtol=1e-5)

    print("KERNEL_OK")
</pallas_src>

<mosaic_0001>
module attributes {stable_mosaic.version = 11 : i64} {
  func.func @_vq_kernel(%arg0: i32, %arg1: memref<32x512xf32, #tpu.memory_space<vmem>>, %arg2: memref<128x32xf32, #tpu.memory_space<vmem>>, %arg3: memref<32x128xf32, #tpu.memory_space<vmem>>, %arg4: memref<128x1xf32, #tpu.memory_space<vmem>>, %arg5: memref<32x512xf32, #tpu.memory_space<vmem>>, %arg6: memref<8x128xf32, #tpu.memory_space<vmem>>) attributes {dimension_semantics = [#tpu.dimension_semantics<parallel>], iteration_bounds = array<i64: 1>, scalar_prefetch = 0 : i64, scratch_operands = 0 : i64, tpu.core_type = #tpu.core_type<tc>, window_params = [{transform_indices = @transform_0, window_bounds = array<i64: 32, 512>}, {pipeline_mode = #tpu.pipeline_mode<synchronous>, transform_indices = @transform_1, window_bounds = array<i64: 128, 32>}, {pipeline_mode = #tpu.pipeline_mode<synchronous>, transform_indices = @transform_2, window_bounds = array<i64: 32, 128>}, {pipeline_mode = #tpu.pipeline_mode<synchronous>, transform_indices = @transform_3, window_bounds = array<i64: 128, 1>}, {transform_indices = @transform_4, window_bounds = array<i64: 32, 512>}, {transform_indices = @transform_5, window_bounds = array<i64: 8, 128>}]} {
    %c0 = arith.constant 0 : index
    %c0_0 = arith.constant 0 : index
    %0 = vector.load %arg1[%c0, %c0_0] : memref<32x512xf32, #tpu.memory_space<vmem>>, vector<32x512xf32>
    %c0_1 = arith.constant 0 : index
    %c0_2 = arith.constant 0 : index
    %1 = vector.load %arg2[%c0_1, %c0_2] : memref<128x32xf32, #tpu.memory_space<vmem>>, vector<128x32xf32>
    %c0_3 = arith.constant 0 : index
    %c0_4 = arith.constant 0 : index
    %2 = vector.load %arg3[%c0_3, %c0_4] : memref<32x128xf32, #tpu.memory_space<vmem>>, vector<32x128xf32>
    %c0_5 = arith.constant 0 : index
    %c0_6 = arith.constant 0 : index
    %3 = vector.load %arg4[%c0_5, %c0_6] : memref<128x1xf32, #tpu.memory_space<vmem>>, vector<128x1xf32>
    %cst = arith.constant dense<0.000000e+00> : vector<128x512xf32>
    %4 = tpu.matmul %1, %0, %cst {dimension_numbers = #tpu.dot_dimension_numbers<[1], [0], [0], [1], [0, 0, 1, 1], [], []>} : vector<128x32xf32>, vector<32x512xf32>, vector<128x512xf32> -> vector<128x512xf32>
    %cst_7 = arith.constant 2.000000e+00 : f32
    %5 = vector.broadcast %cst_7 : f32 to vector<128x512xf32>
    %6 = arith.mulf %5, %4 : vector<128x512xf32>
    %7 = vector.broadcast %3 : vector<128x1xf32> to vector<128x512xf32>
    %8 = arith.subf %7, %6 : vector<128x512xf32>
    %cst_8 = arith.constant dense<0x7F800000> : vector<512xf32>
    %9 = vector.multi_reduction <minimumf>, %8, %cst_8 [0] : vector<128x512xf32> to vector<512xf32>
    %10 = vector.shape_cast %9 : vector<512xf32> to vector<1x512xf32>
    %11 = tpu.iota {dimensions = array<i32: 0>} : vector<128x512xi32>
    %12 = vector.broadcast %10 : vector<1x512xf32> to vector<128x512xf32>
    %13 = arith.cmpf oeq, %8, %12 : vector<128x512xf32>
    %c128_i32 = arith.constant 128 : i32
    %14 = vector.broadcast %c128_i32 : i32 to vector<128x512xi32>
    %15 = arith.select %13, %11, %14 : vector<128x512xi1>, vector<128x512xi32>
    %cst_9 = arith.constant dense<2147483647> : vector<512xi32>
    %16 = vector.multi_reduction <minsi>, %15, %cst_9 [0] : vector<128x512xi32> to vector<512xi32>
    %17 = vector.shape_cast %16 : vector<512xi32> to vector<1x512xi32>
    %18 = vector.broadcast %17 : vector<1x512xi32> to vector<128x512xi32>
    %19 = arith.cmpi eq, %11, %18 : vector<128x512xi32>
    %20 = arith.extui %19 : vector<128x512xi1> to vector<128x512xi32>
    %21 = arith.sitofp %20 : vector<128x512xi32> to vector<128x512xf32>
    %cst_10 = arith.constant dense<0.000000e+00> : vector<32x512xf32>
    %22 = tpu.matmul %2, %21, %cst_10 {dimension_numbers = #tpu.dot_dimension_numbers<[1], [0], [0], [1], [0, 0, 1, 1], [], []>} : vector<32x128xf32>, vector<128x512xf32>, vector<32x512xf32> -> vector<32x512xf32>
    %c0_11 = arith.constant 0 : index
    %c0_12 = arith.constant 0 : index
    %23 = vector.load %arg5[%c0_11, %c0_12] : memref<32x512xf32, #tpu.memory_space<vmem>>, vector<32x512xf32>
    tpu.vector_store %arg5[%c0_11, %c0_12], %22 {strides = array<i32>} : memref<32x512xf32, #tpu.memory_space<vmem>>, vector<32x512xf32>,
    %24 = arith.subf %0, %22 : vector<32x512xf32>
    %25 = arith.mulf %24, %24 : vector<32x512xf32>
    %26 = vector.extract_strided_slice %25 {offsets = [0, 0], sizes = [8, 512], strides = [1, 1]} : vector<32x512xf32> to vector<8x512xf32>
    %27 = vector.extract_strided_slice %25 {offsets = [8, 0], sizes = [8, 512], strides = [1, 1]} : vector<32x512xf32> to vector<8x512xf32>
    %28 = arith.addf %26, %27 : vector<8x512xf32>
    %29 = vector.extract_strided_slice %25 {offsets = [16, 0], sizes = [8, 512], strides = [1, 1]} : vector<32x512xf32> to vector<8x512xf32>
    %30 = arith.addf %28, %29 : vector<8x512xf32>
    %31 = vector.extract_strided_slice %25 {offsets = [24, 0], sizes = [8, 512], strides = [1, 1]} : vector<32x512xf32> to vector<8x512xf32>
    %32 = arith.addf %30, %31 : vector<8x512xf32>
    %33 = vector.extract_strided_slice %32 {offsets = [0, 0], sizes = [8, 128], strides = [1, 1]} : vector<8x512xf32> to vector<8x128xf32>
    %34 = vector.extract_strided_slice %32 {offsets = [0, 128], sizes = [8, 128], strides = [1, 1]} : vector<8x512xf32> to vector<8x128xf32>
    %35 = arith.addf %33, %34 : vector<8x128xf32>
    %36 = vector.extract_strided_slice %32 {offsets = [0, 256], sizes = [8, 128], strides = [1, 1]} : vector<8x512xf32> to vector<8x128xf32>
    %37 = arith.addf %35, %36 : vector<8x128xf32>
    %38 = vector.extract_strided_slice %32 {offsets = [0, 384], sizes = [8, 128], strides = [1, 1]} : vector<8x512xf32> to vector<8x128xf32>
    %39 = arith.addf %37, %38 : vector<8x128xf32>
    %c0_13 = arith.constant 0 : index
    %c0_14 = arith.constant 0 : index
    %40 = vector.load %arg6[%c0_13, %c0_14] : memref<8x128xf32, #tpu.memory_space<vmem>>, vector<8x128xf32>
    tpu.vector_store %arg6[%c0_13, %c0_14], %39 {strides = array<i32>} : memref<8x128xf32, #tpu.memory_space<vmem>>, vector<8x128xf32>,
    return
  }
  func.func @transform_0(%arg0: i32) -> (i32, i32) {
    %c0_i32 = arith.constant 0 : i32
    %c0_i32_0 = arith.constant 0 : i32
    return %c0_i32, %arg0 : i32, i32
  }
  func.func @transform_1(%arg0: i32) -> (i32, i32) {
    %c0_i32 = arith.constant 0 : i32
    %c0_i32_0 = arith.constant 0 : i32
    %c0_i32_1 = arith.constant 0 : i32
    return %c0_i32, %c0_i32_0 : i32, i32
  }
  func.func @transform_2(%arg0: i32) -> (i32, i32) {
    %c0_i32 = arith.constant 0 : i32
    %c0_i32_0 = arith.constant 0 : i32
    %c0_i32_1 = arith.constant 0 : i32
    return %c0_i32, %c0_i32_0 : i32, i32
  }
  func.func @transform_3(%arg0: i32) -> (i32, i32) {
    %c0_i32 = arith.constant 0 : i32
    %c0_i32_0 = arith.constant 0 : i32
    %c0_i32_1 = arith.constant 0 : i32
    return %c0_i32, %c0_i32_0 : i32, i32
  }
  func.func @transform_4(%arg0: i32) -> (i32, i32) {
    %c0_i32 = arith.constant 0 : i32
    %c0_i32_0 = arith.constant 0 : i32
    return %c0_i32, %arg0 : i32, i32
  }
  func.func @transform_5(%arg0: i32) -> (i32, i32) {
    %c0_i32 = arith.constant 0 : i32
    %c0_i32_0 = arith.constant 0 : i32
    return %arg0, %c0_i32 : i32, i32
  }
}

</mosaic_0001>

<llo_original>
// kernel: vector_quantizer.1
$region0: #{vector_quantizer.1}
  #allocation0 [shape = 'u32[]', space=smem, size = 0x4, offset = 0x4, fixed_abs, tag = 'smem constant byte address 0x4 - core index']
  #allocation1 [shape = 'u32[144,128]{1,0:T(1,128)}', space=vmem, size = 0x12000, scoped, tag = 'internal scratch']
  %s0 = inlined_call_operand.vmem [shape: f32[32,512], index: 0, kind: input, shape index: {}]
  %s1 = inlined_call_operand.vmem [shape: f32[128,32], index: 1, kind: input, shape index: {}]
  %s2 = inlined_call_operand.vmem [shape: f32[32,128], index: 2, kind: input, shape index: {}]
  %s3 = inlined_call_operand.vmem [shape: f32[128,1], index: 3, kind: input, shape index: {}]
  %s4 = inlined_call_operand.vmem [shape: f32[32,512], index: 4, kind: output, shape index: {0}]
  %s5 = inlined_call_operand.vmem [shape: f32[8,128], index: 5, kind: output, shape index: {1}]
  %6 = xla_tuple %s4, %s5
  %s7 = sld [smem:[#allocation0]]
  $region34: #{vector_quantizer.1} parent=0
    _
  %s9 = ssub.s32 1, %s7
  %s10 = scalar_select 0, %s9, %s7
  // Predicated region
  $region2: #{vector_quantizer.1} parent=0 // pred_check
    _
  $region3: #{vector_quantizer.1} parent=0 // pred_check_branch
    %12 = sbr.rel (0) target = $region5
  $region4: #{vector_quantizer.1} parent=0 // pred_region
    _
  $region5: #{vector_quantizer.1} parent=0 // pred_fallthru
    _
  // Predicated region
  $region6: #{vector_quantizer.1} parent=0 // pred_check
    _
  $region7: #{vector_quantizer.1} parent=0 // pred_check_branch
    %14 = sbr.rel (0) target = $region9
  $region8: #{vector_quantizer.1} parent=0 // pred_region
    _
  $region9: #{vector_quantizer.1} parent=0 // pred_fallthru
    _
  // Predicated region
  $region10: #{vector_quantizer.1} parent=0 // pred_check
    _
  $region11: #{vector_quantizer.1} parent=0 // pred_check_branch
    %16 = sbr.rel (0) target = $region13
  $region12: #{vector_quantizer.1} parent=0 // pred_region
    _
  $region13: #{vector_quantizer.1} parent=0 // pred_fallthru
    _
  // Predicated region
  $region14: #{vector_quantizer.1} parent=0 // pred_check
    _
  $region15: #{vector_quantizer.1} parent=0 // pred_check_branch
    %18 = sbr.rel (0) target = $region17
  $region16: #{vector_quantizer.1} parent=0 // pred_region
    _
  $region17: #{vector_quantizer.1} parent=0 // pred_fallthru
    _
  %v19 = vld [vmem:[%s0] sm:$0xff]
  %v20 = vld [vmem:[%s0 + $0x8] sm:$0xff]
  %v21 = vld [vmem:[%s0 + $0x10] sm:$0xff]
  %v22 = vld [vmem:[%s0 + $0x18] sm:$0xff]
  %v23 = vld [vmem:[%s0 + $0x20] sm:$0xff]
  %v24 = vld [vmem:[%s0 + $0x28] sm:$0xff]
  %v25 = vld [vmem:[%s0 + $0x30] sm:$0xff]
  %v26 = vld [vmem:[%s0 + $0x38] sm:$0xff]
  %v27 = vld [vmem:[%s0 + $0x40] sm:$0xff]
  %v28 = vld [vmem:[%s0 + $0x48] sm:$0xff]
  %v29 = vld [vmem:[%s0 + $0x50] sm:$0xff]
  %v30 = vld [vmem:[%s0 + $0x58] sm:$0xff]
  %v31 = vld [vmem:[%s0 + $0x60] sm:$0xff]
  %v32 = vld [vmem:[%s0 + $0x68] sm:$0xff]
  %v33 = vld [vmem:[%s0 + $0x70] sm:$0xff]
  %v34 = vld [vmem:[%s0 + $0x78] sm:$0xff]
  %v35 = vld [vmem:[%s1] sm:$0xff]
  %v36 = vld [vmem:[%s1 + $0x8] sm:$0xff]
  %v37 = vld [vmem:[%s1 + $0x10] sm:$0xff]
  %v38 = vld [vmem:[%s1 + $0x18] sm:$0xff]
  %v39 = vld [vmem:[%s1 + $0x20] sm:$0xff]
  %v40 = vld [vmem:[%s1 + $0x28] sm:$0xff]
  %v41 = vld [vmem:[%s1 + $0x30] sm:$0xff]
  %v42 = vld [vmem:[%s1 + $0x38] sm:$0xff]
  %v43 = vld [vmem:[%s1 + $0x40] sm:$0xff]
  %v44 = vld [vmem:[%s1 + $0x48] sm:$0xff]
  %v45 = vld [vmem:[%s1 + $0x50] sm:$0xff]
  %v46 = vld [vmem:[%s1 + $0x58] sm:$0xff]
  %v47 = vld [vmem:[%s1 + $0x60] sm:$0xff]
  %v48 = vld [vmem:[%s1 + $0x68] sm:$0xff]
  %v49 = vld [vmem:[%s1 + $0x70] sm:$0xff]
  %v50 = vld [vmem:[%s1 + $0x78] sm:$0xff]
  %v51 = vld [vmem:[%s2] sm:$0xff]
  %v52 = vld [vmem:[%s2 + $0x8] sm:$0xff]
  %v53 = vld [vmem:[%s2 + $0x10] sm:$0xff]
  %v54 = vld [vmem:[%s2 + $0x18] sm:$0xff]
  %v55 = vld [vmem:[%s3] sm:$0xff]
  %v56 = vld [vmem:[%s3 + $0x8] sm:$0xff]
  %v57 = vld [vmem:[%s3 + $0x10] sm:$0xff]
  %v58 = vld [vmem:[%s3 + $0x18] sm:$0xff]
  %v59 = vld [vmem:[%s3 + $0x20] sm:$0xff]
  %v60 = vld [vmem:[%s3 + $0x28] sm:$0xff]
  %v61 = vld [vmem:[%s3 + $0x30] sm:$0xff]
  %v62 = vld [vmem:[%s3 + $0x38] sm:$0xff]
  %v63 = vld [vmem:[%s3 + $0x40] sm:$0xff]
  %v64 = vld [vmem:[%s3 + $0x48] sm:$0xff]
  %v65 = vld [vmem:[%s3 + $0x50] sm:$0xff]
  %v66 = vld [vmem:[%s3 + $0x58] sm:$0xff]
  %v67 = vld [vmem:[%s3 + $0x60] sm:$0xff]
  %v68 = vld [vmem:[%s3 + $0x68] sm:$0xff]
  %v69 = vld [vmem:[%s3 + $0x70] sm:$0xff]
  %v70 = vld [vmem:[%s3 + $0x78] sm:$0xff]
  %vm71 = vcmask 261120
  %v73 = vsel %vm71, %v35, 0
  %v76 = vsel %vm71, %v36, 0
  %v79 = vsel %vm71, %v37, 0
  %v82 = vsel %vm71, %v38, 0
  %v85 = vsel %vm71, %v39, 0
  %v88 = vsel %vm71, %v40, 0
  %v91 = vsel %vm71, %v41, 0
  %v94 = vsel %vm71, %v42, 0
  %v97 = vsel %vm71, %v43, 0
  %v100 = vsel %vm71, %v44, 0
  %v103 = vsel %vm71, %v45, 0
  %v106 = vsel %vm71, %v46, 0
  %v109 = vsel %vm71, %v47, 0
  %v112 = vsel %vm71, %v48, 0
  %v115 = vsel %vm71, %v49, 0
  %v118 = vsel %vm71, %v50, 0
  %120 = vmatprep.subr.mxu0 %v20
  %121 = vmatpush1.msra.mxu0 %v19
  %122 = vmatprep.subr.mxu0 %v24
  %123 = vmatpush1.msra.mxu0 %v23
  %124 = vmatprep.subr.mxu0 %v28
  %125 = vmatpush1.msra.mxu0 %v27
  %126 = vmatprep.subr.mxu0 %v32
  %127 = vmatpush1.msra.mxu0 %v31
  %128 = vmatprep.subr.mxu0 0.0
  %129 = vmatpush1.msra.mxu0 0.0
  %130 = vmatprep.subr.mxu0 0.0
  %131 = vmatpush1.msra.mxu0 0.0
  %132 = vmatprep.subr.mxu0 0.0
  %133 = vmatpush1.msra.mxu0 0.0
  %134 = vmatprep.subr.mxu0 0.0
  %135 = vmatpush1.msra.mxu0 0.0
  %136 = vmatprep.subr.mxu0 0.0
  %137 = vmatpush1.msra.mxu0 0.0
  %138 = vmatprep.subr.mxu0 0.0
  %139 = vmatpush1.msra.mxu0 0.0
  %140 = vmatprep.subr.mxu0 0.0
  %141 = vmatpush1.msra.mxu0 0.0
  %142 = vmatprep.subr.mxu0 0.0
  %143 = vmatpush1.msra.mxu0 0.0
  %144 = vmatprep.subr.mxu0 0.0
  %145 = vmatpush1.msra.mxu0 0.0
  %146 = vmatprep.subr.mxu0 0.0
  %147 = vmatpush1.msra.mxu0 0.0
  %148 = vmatprep.subr.mxu0 0.0
  %149 = vmatpush1.msra.mxu0 0.0
  %150 = vmatprep.subr.mxu0 0.0
  %151 = vmatpush1.msra.mxu0 0.0
  %152 = vmatprep.subr.mxu0 0.0
  %153 = vmatpush1.msra.mxu0 0.0
  %154 = vmatprep.subr.mxu0 0.0
  %155 = vmatpush1.msra.mxu0 0.0
  %156 = vmatprep.subr.mxu0 0.0
  %157 = vmatpush1.msra.mxu0 0.0
  %158 = vmatprep.subr.mxu0 0.0
  %159 = vmatpush1.msra.mxu0 0.0
  %160 = vmatprep.subr.mxu0 0.0
  %161 = vmatpush1.msra.mxu0 0.0
  %162 = vmatprep.subr.mxu0 0.0
  %163 = vmatpush1.msra.mxu0 0.0
  %164 = vmatprep.subr.mxu0 0.0
  %165 = vmatpush1.msra.mxu0 0.0
  %166 = vmatprep.subr.mxu0 0.0
  %167 = vmatpush1.msra.mxu0 0.0
  %168 = vmatprep.subr.mxu0 0.0
  %169 = vmatpush1.msra.mxu0 0.0
  %170 = vmatprep.subr.mxu0 0.0
  %171 = vmatpush1.msra.mxu0 0.0
  %172 = vmatprep.subr.mxu0 0.0
  %173 = vmatpush1.msra.mxu0 0.0
  %174 = vmatprep.subr.mxu0 0.0
  %175 = vmatpush1.msra.mxu0 0.0
  %176 = vmatprep.subr.mxu0 0.0
  %177 = vmatpush1.msra.mxu0 0.0
  %178 = vmatprep.subr.mxu0 0.0
  %179 = vmatpush1.msra.mxu0 0.0
  %180 = vmatprep.subr.mxu0 0.0
  %181 = vmatpush1.msra.mxu0 0.0
  %182 = vmatprep.subr.mxu0 0.0
  %183 = vmatpush1.msra.mxu0 0.0
  %184 = vmatprep.mubr.f32.mxu0 0.0
  %185 = vmatmul.mubr.f32.gmra.mrb[0].mxu0 %v73
  %v186 = vpop.f32.mrb[0].mxu0
  %v187 = vadd.f32 0.0, %v186
  %v188 = vpop.f32.mrb[0].mxu0
  %v189 = vadd.f32 0.0, %v188
  %190 = vmatprep.mubr.f32.mxu0 0.0
  %191 = vmatmul.mubr.f32.gmra.mrb[0].mxu0 %v76
  %v192 = vpop.f32.mrb[0].mxu0
  %v193 = vadd.f32 0.0, %v192
  %v194 = vpop.f32.mrb[0].mxu0
  %v195 = vadd.f32 0.0, %v194
  %196 = vmatprep.mubr.f32.mxu0 0.0
  %197 = vmatmul.mubr.f32.gmra.mrb[0].mxu0 %v79
  %v198 = vpop.f32.mrb[0].mxu0
  %v199 = vadd.f32 0.0, %v198
  %v200 = vpop.f32.mrb[0].mxu0
  %v201 = vadd.f32 0.0, %v200
  %202 = vmatprep.mubr.f32.mxu0 0.0
  %203 = vmatmul.mubr.f32.gmra.mrb[0].mxu0 %v82
  %v204 = vpop.f32.mrb[0].mxu0
  %v205 = vadd.f32 0.0, %v204
  %v206 = vpop.f32.mrb[0].mxu0
  %v207 = vadd.f32 0.0, %v206
  %208 = vmatprep.mubr.f32.mxu0 0.0
  %209 = vmatmul.mubr.f32.gmra.mrb[0].mxu0 %v85
  %v210 = vpop.f32.mrb[0].mxu0
  %v211 = vadd.f32 0.0, %v210
  %v212 = vpop.f32.mrb[0].mxu0
  %v213 = vadd.f32 0.0, %v212
  %214 = vmatprep.mubr.f32.mxu0 0.0
  %215 = vmatmul.mubr.f32.gmra.mrb[0].mxu0 %v88
  %v216 = vpop.f32.mrb[0].mxu0
  %v217 = vadd.f32 0.0, %v216
  %v218 = vpop.f32.mrb[0].mxu0
  %v219 = vadd.f32 0.0, %v218
  %220 = vmatprep.mubr.f32.mxu0 0.0
  %221 = vmatmul.mubr.f32.gmra.mrb[0].mxu0 %v91
  %v222 = vpop.f32.mrb[0].mxu0
  %v223 = vadd.f32 0.0, %v222
  %v224 = vpop.f32.mrb[0].mxu0
  %v225 = vadd.f32 0.0, %v224
  %226 = vmatprep.mubr.f32.mxu0 0.0
  %227 = vmatmul.mubr.f32.gmra.mrb[0].mxu0 %v94
  %v228 = vpop.f32.mrb[0].mxu0
  %v229 = vadd.f32 0.0, %v228
  %v230 = vpop.f32.mrb[0].mxu0
  %v231 = vadd.f32 0.0, %v230
  %232 = vmatprep.mubr.f32.mxu0 0.0
  %233 = vmatmul.mubr.f32.gmra.mrb[0].mxu0 %v97
  %v234 = vpop.f32.mrb[0].mxu0
  %v235 = vadd.f32 0.0, %v234
  %v236 = vpop.f32.mrb[0].mxu0
  %v237 = vadd.f32 0.0, %v236
  %238 = vmatprep.mubr.f32.mxu0 0.0
  %239 = vmatmul.mubr.f32.gmra.mrb[0].mxu0 %v100
  %v240 = vpop.f32.mrb[0].mxu0
  %v241 = vadd.f32 0.0, %v240
  %v242 = vpop.f32.mrb[0].mxu0
  %v243 = vadd.f32 0.0, %v242
  %244 = vmatprep.mubr.f32.mxu0 0.0
  %245 = vmatmul.mubr.f32.gmra.mrb[0].mxu0 %v103
  %v246 = vpop.f32.mrb[0].mxu0
  %v247 = vadd.f32 0.0, %v246
  %v248 = vpop.f32.mrb[0].mxu0
  %v249 = vadd.f32 0.0, %v248
  %250 = vmatprep.mubr.f32.mxu0 0.0
  %251 = vmatmul.mubr.f32.gmra.mrb[0].mxu0 %v106
  %v252 = vpop.f32.mrb[0].mxu0
  %v253 = vadd.f32 0.0, %v252
  %v254 = vpop.f32.mrb[0].mxu0
  %v255 = vadd.f32 0.0, %v254
  %256 = vmatprep.mubr.f32.mxu0 0.0
  %257 = vmatmul.mubr.f32.gmra.mrb[0].mxu0 %v109
  %v258 = vpop.f32.mrb[0].mxu0
  %v259 = vadd.f32 0.0, %v258
  %v260 = vpop.f32.mrb[0].mxu0
  %v261 = vadd.f32 0.0, %v260
  %262 = vmatprep.mubr.f32.mxu0 0.0
  %263 = vmatmul.mubr.f32.gmra.mrb[0].mxu0 %v112
  %v264 = vpop.f32.mrb[0].mxu0
  %v265 = vadd.f32 0.0, %v264
  %v266 = vpop.f32.mrb[0].mxu0
  %v267 = vadd.f32 0.0, %v266
  %268 = vmatprep.mubr.f32.mxu0 0.0
  %269 = vmatmul.mubr.f32.gmra.mrb[0].mxu0 %v115
  %v270 = vpop.f32.mrb[0].mxu0
  %v271 = vadd.f32 0.0, %v270
  %v272 = vpop.f32.mrb[0].mxu0
  %v273 = vadd.f32 0.0, %v272
  %274 = vmatprep.mubr.f32.mxu0 0.0
  %275 = vmatmul.mubr.f32.gmra.mrb[0].mxu0 %v118
  %v276 = vpop.f32.mrb[0].mxu0
  %v277 = vadd.f32 0.0, %v276
  %v278 = vpop.f32.mrb[0].mxu0
  %v279 = vadd.f32 0.0, %v278
  %280 = vdwg.mxu0
  %281 = vmatprep.subr.mxu0 %v22
  %282 = vmatpush1.msra.mxu0 %v21
  %283 = vmatprep.subr.mxu0 %v26
  %284 = vmatpush1.msra.mxu0 %v25
  %285 = vmatprep.subr.mxu0 %v30
  %286 = vmatpush1.msra.mxu0 %v29
  %287 = vmatprep.subr.mxu0 %v34
  %288 = vmatpush1.msra.mxu0 %v33
  %289 = vmatprep.subr.mxu0 0.0
  %290 = vmatpush1.msra.mxu0 0.0
  %291 = vmatprep.subr.mxu0 0.0
  %292 = vmatpush1.msra.mxu0 0.0
  %293 = vmatprep.subr.mxu0 0.0
  %294 = vmatpush1.msra.mxu0 0.0
  %295 = vmatprep.subr.mxu0 0.0
  %296 = vmatpush1.msra.mxu0 0.0
  %297 = vmatprep.subr.mxu0 0.0
  %298 = vmatpush1.msra.mxu0 0.0
  %299 = vmatprep.subr.mxu0 0.0
  %300 = vmatpush1.msra.mxu0 0.0
  %301 = vmatprep.subr.mxu0 0.0
  %302 = vmatpush1.msra.mxu0 0.0
  %303 = vmatprep.subr.mxu0 0.0
  %304 = vmatpush1.msra.mxu0 0.0
  %305 = vmatprep.subr.mxu0 0.0
  %306 = vmatpush1.msra.mxu0 0.0
  %307 = vmatprep.subr.mxu0 0.0
  %308 = vmatpush1.msra.mxu0 0.0
  %309 = vmatprep.subr.mxu0 0.0
  %310 = vmatpush1.msra.mxu0 0.0
  %311 = vmatprep.subr.mxu0 0.0
  %312 = vmatpush1.msra.mxu0 0.0
  %313 = vmatprep.subr.mxu0 0.0
  %314 = vmatpush1.msra.mxu0 0.0
  %315 = vmatprep.subr.mxu0 0.0
  %316 = vmatpush1.msra.mxu0 0.0
  %317 = vmatprep.subr.mxu0 0.0
  %318 = vmatpush1.msra.mxu0 0.0
  %319 = vmatprep.subr.mxu0 0.0
  %320 = vmatpush1.msra.mxu0 0.0
  %321 = vmatprep.subr.mxu0 0.0
  %322 = vmatpush1.msra.mxu0 0.0
  %323 = vmatprep.subr.mxu0 0.0
  %324 = vmatpush1.msra.mxu0 0.0
  %325 = vmatprep.subr.mxu0 0.0
  %326 = vmatpush1.msra.mxu0 0.0
  %327 = vmatprep.subr.mxu0 0.0
  %328 = vmatpush1.msra.mxu0 0.0
  %329 = vmatprep.subr.mxu0 0.0
  %330 = vmatpush1.msra.mxu0 0.0
  %331 = vmatprep.subr.mxu0 0.0
  %332 = vmatpush1.msra.mxu0 0.0
  %333 = vmatprep.subr.mxu0 0.0
  %334 = vmatpush1.msra.mxu0 0.0
  %335 = vmatprep.subr.mxu0 0.0
  %336 = vmatpush1.msra.mxu0 0.0
  %337 = vmatprep.subr.mxu0 0.0
  %338 = vmatpush1.msra.mxu0 0.0
  %339 = vmatprep.subr.mxu0 0.0
  %340 = vmatpush1.msra.mxu0 0.0
  %341 = vmatprep.subr.mxu0 0.0
  %342 = vmatpush1.msra.mxu0 0.0
  %343 = vmatprep.subr.mxu0 0.0
  %344 = vmatpush1.msra.mxu0 0.0
  %345 = vmatprep.mubr.f32.mxu0 0.0
  %346 = vmatmul.mubr.f32.gmra.mrb[0].mxu0 %v73
  %v347 = vpop.f32.mrb[0].mxu0
  %v348 = vadd.f32 0.0, %v347
  %v349 = vpop.f32.mrb[0].mxu0
  %v350 = vadd.f32 0.0, %v349
  %351 = vmatprep.mubr.f32.mxu0 0.0
  %352 = vmatmul.mubr.f32.gmra.mrb[0].mxu0 %v76
  %v353 = vpop.f32.mrb[0].mxu0
  %v354 = vadd.f32 0.0, %v353
  %v355 = vpop.f32.mrb[0].mxu0
  %v356 = vadd.f32 0.0, %v355
  %357 = vmatprep.mubr.f32.mxu0 0.0
  %358 = vmatmul.mubr.f32.gmra.mrb[0].mxu0 %v79
  %v359 = vpop.f32.mrb[0].mxu0
  %v360 = vadd.f32 0.0, %v359
  %v361 = vpop.f32.mrb[0].mxu0
  %v362 = vadd.f32 0.0, %v361
  %363 = vmatprep.mubr.f32.mxu0 0.0
  %364 = vmatmul.mubr.f32.gmra.mrb[0].mxu0 %v82
  %v365 = vpop.f32.mrb[0].mxu0
  %v366 = vadd.f32 0.0, %v365
  %v367 = vpop.f32.mrb[0].mxu0
  %v368 = vadd.f32 0.0, %v367
  %369 = vmatprep.mubr.f32.mxu0 0.0
  %370 = vmatmul.mubr.f32.gmra.mrb[0].mxu0 %v85
  %v371 = vpop.f32.mrb[0].mxu0
  %v372 = vadd.f32 0.0, %v371
  %v373 = vpop.f32.mrb[0].mxu0
  %v374 = vadd.f32 0.0, %v373
  %375 = vmatprep.mubr.f32.mxu0 0.0
  %376 = vmatmul.mubr.f32.gmra.mrb[0].mxu0 %v88
  %v377 = vpop.f32.mrb[0].mxu0
  %v378 = vadd.f32 0.0, %v377
  %v379 = vpop.f32.mrb[0].mxu0
  %v380 = vadd.f32 0.0, %v379
  %381 = vmatprep.mubr.f32.mxu0 0.0
  %382 = vmatmul.mubr.f32.gmra.mrb[0].mxu0 %v91
  %v383 = vpop.f32.mrb[0].mxu0
  %v384 = vadd.f32 0.0, %v383
  %v385 = vpop.f32.mrb[0].mxu0
  %v386 = vadd.f32 0.0, %v385
  %387 = vmatprep.mubr.f32.mxu0 0.0
  %388 = vmatmul.mubr.f32.gmra.mrb[0].mxu0 %v94
  %v389 = vpop.f32.mrb[0].mxu0
  %v390 = vadd.f32 0.0, %v389
  %v391 = vpop.f32.mrb[0].mxu0
  %v392 = vadd.f32 0.0, %v391
  %393 = vmatprep.mubr.f32.mxu0 0.0
  %394 = vmatmul.mubr.f32.gmra.mrb[0].mxu0 %v97
  %v395 = vpop.f32.mrb[0].mxu0
  %v396 = vadd.f32 0.0, %v395
  %v397 = vpop.f32.mrb[0].mxu0
  %v398 = vadd.f32 0.0, %v397
  %399 = vmatprep.mubr.f32.mxu0 0.0
  %400 = vmatmul.mubr.f32.gmra.mrb[0].mxu0 %v100
  %v401 = vpop.f32.mrb[0].mxu0
  %v402 = vadd.f32 0.0, %v401
  %v403 = vpop.f32.mrb[0].mxu0
  %v404 = vadd.f32 0.0, %v403
  %405 = vmatprep.mubr.f32.mxu0 0.0
  %406 = vmatmul.mubr.f32.gmra.mrb[0].mxu0 %v103
  %v407 = vpop.f32.mrb[0].mxu0
  %v408 = vadd.f32 0.0, %v407
  %v409 = vpop.f32.mrb[0].mxu0
  %v410 = vadd.f32 0.0, %v409
  %411 = vmatprep.mubr.f32.mxu0 0.0
  %412 = vmatmul.mubr.f32.gmra.mrb[0].mxu0 %v106
  %v413 = vpop.f32.mrb[0].mxu0
  %v414 = vadd.f32 0.0, %v413
  %v415 = vpop.f32.mrb[0].mxu0
  %v416 = vadd.f32 0.0, %v415
  %417 = vmatprep.mubr.f32.mxu0 0.0
  %418 = vmatmul.mubr.f32.gmra.mrb[0].mxu0 %v109
  %v419 = vpop.f32.mrb[0].mxu0
  %v420 = vadd.f32 0.0, %v419
  %v421 = vpop.f32.mrb[0].mxu0
  %v422 = vadd.f32 0.0, %v421
  %423 = vmatprep.mubr.f32.mxu0 0.0
  %424 = vmatmul.mubr.f32.gmra.mrb[0].mxu0 %v112
  %v425 = vpop.f32.mrb[0].mxu0
  %v426 = vadd.f32 0.0, %v425
  %v427 = vpop.f32.mrb[0].mxu0
  %v428 = vadd.f32 0.0, %v427
  %429 = vmatprep.mubr.f32.mxu0 0.0
  %430 = vmatmul.mubr.f32.gmra.mrb[0].mxu0 %v115
  %v431 = vpop.f32.mrb[0].mxu0
  %v432 = vadd.f32 0.0, %v431
  %v433 = vpop.f32.mrb[0].mxu0
  %v434 = vadd.f32 0.0, %v433
  %435 = vmatprep.mubr.f32.mxu0 0.0
  %436 = vmatmul.mubr.f32.gmra.mrb[0].mxu0 %v118
  %v437 = vpop.f32.mrb[0].mxu0
  %v438 = vadd.f32 0.0, %v437
  %v439 = vpop.f32.mrb[0].mxu0
  %v440 = vadd.f32 0.0, %v439
  %441 = vdwg.mxu0
  %v442 = vmul.f32 %v187, 2.0
  %v443 = vmul.f32 %v189, 2.0
  %v444 = vmul.f32 %v348, 2.0
  %v445 = vmul.f32 %v350, 2.0
  %v446 = vmul.f32 %v193, 2.0
  %v447 = vmul.f32 %v195, 2.0
  %v448 = vmul.f32 %v354, 2.0
  %v449 = vmul.f32 %v356, 2.0
  %v450 = vmul.f32 %v199, 2.0
  %v451 = vmul.f32 %v201, 2.0
  %v452 = vmul.f32 %v360, 2.0
  %v453 = vmul.f32 %v362, 2.0
  %v454 = vmul.f32 %v205, 2.0
  %v455 = vmul.f32 %v207, 2.0
  %v456 = vmul.f32 %v366, 2.0
  %v457 = vmul.f32 %v368, 2.0
  %v458 = vmul.f32 %v211, 2.0
  %v459 = vmul.f32 %v213, 2.0
  %v460 = vmul.f32 %v372, 2.0
  %v461 = vmul.f32 %v374, 2.0
  %v462 = vmul.f32 %v217, 2.0
  %v463 = vmul.f32 %v219, 2.0
  %v464 = vmul.f32 %v378, 2.0
  %v465 = vmul.f32 %v380, 2.0
  %v466 = vmul.f32 %v223, 2.0
  %v467 = vmul.f32 %v225, 2.0
  %v468 = vmul.f32 %v384, 2.0
  %v469 = vmul.f32 %v386, 2.0
  %v470 = vmul.f32 %v229, 2.0
  %v471 = vmul.f32 %v231, 2.0
  %v472 = vmul.f32 %v390, 2.0
  %v473 = vmul.f32 %v392, 2.0
  %v474 = vmul.f32 %v235, 2.0
  %v475 = vmul.f32 %v237, 2.0
  %v476 = vmul.f32 %v396, 2.0
  %v477 = vmul.f32 %v398, 2.0
  %v478 = vmul.f32 %v241, 2.0
  %v479 = vmul.f32 %v243, 2.0
  %v480 = vmul.f32 %v402, 2.0
  %v481 = vmul.f32 %v404, 2.0
  %v482 = vmul.f32 %v247, 2.0
  %v483 = vmul.f32 %v249, 2.0
  %v484 = vmul.f32 %v408, 2.0
  %v485 = vmul.f32 %v410, 2.0
  %v486 = vmul.f32 %v253, 2.0
  %v487 = vmul.f32 %v255, 2.0
  %v488 = vmul.f32 %v414, 2.0
  %v489 = vmul.f32 %v416, 2.0
  %v490 = vmul.f32 %v259, 2.0
  %v491 = vmul.f32 %v261, 2.0
  %v492 = vmul.f32 %v420, 2.0
  %v493 = vmul.f32 %v422, 2.0
  %v494 = vmul.f32 %v265, 2.0
  %v495 = vmul.f32 %v267, 2.0
  %v496 = vmul.f32 %v426, 2.0
  %v497 = vmul.f32 %v428, 2.0
  %v498 = vmul.f32 %v271, 2.0
  %v499 = vmul.f32 %v273, 2.0
  %v500 = vmul.f32 %v432, 2.0
  %v501 = vmul.f32 %v434, 2.0
  %v502 = vmul.f32 %v277, 2.0
  %v503 = vmul.f32 %v279, 2.0
  %v504 = vmul.f32 %v438, 2.0
  %v505 = vmul.f32 %v440, 2.0
  %507 = vset.pattern.permute.xlu0 0
  %508 = vperm.xlu0 %507, %v55
  %v509 = vpop.permute.xlu0 %508
  %512 = vset.pattern.permute.xlu0 0
  %513 = vperm.xlu0 %512, %v56
  %v514 = vpop.permute.xlu0 %513
  %517 = vset.pattern.permute.xlu0 0
  %518 = vperm.xlu0 %517, %v57
  %v519 = vpop.permute.xlu0 %518
  %522 = vset.pattern.permute.xlu0 0
  %523 = vperm.xlu0 %522, %v58
  %v524 = vpop.permute.xlu0 %523
  %527 = vset.pattern.permute.xlu0 0
  %528 = vperm.xlu0 %527, %v59
  %v529 = vpop.permute.xlu0 %528
  %532 = vset.pattern.permute.xlu0 0
  %533 = vperm.xlu0 %532, %v60
  %v534 = vpop.permute.xlu0 %533
  %537 = vset.pattern.permute.xlu0 0
  %538 = vperm.xlu0 %537, %v61
  %v539 = vpop.permute.xlu0 %538
  %542 = vset.pattern.permute.xlu0 0
  %543 = vperm.xlu0 %542, %v62
  %v544 = vpop.permute.xlu0 %543
  %547 = vset.pattern.permute.xlu0 0
  %548 = vperm.xlu0 %547, %v63
  %v549 = vpop.permute.xlu0 %548
  %552 = vset.pattern.permute.xlu0 0
  %553 = vperm.xlu0 %552, %v64
  %v554 = vpop.permute.xlu0 %553
  %557 = vset.pattern.permute.xlu0 0
  %558 = vperm.xlu0 %557, %v65
  %v559 = vpop.permute.xlu0 %558
  %562 = vset.pattern.permute.xlu0 0
  %563 = vperm.xlu0 %562, %v66
  %v564 = vpop.permute.xlu0 %563
  %567 = vset.pattern.permute.xlu0 0
  %568 = vperm.xlu0 %567, %v67
  %v569 = vpop.permute.xlu0 %568
  %572 = vset.pattern.permute.xlu0 0
  %573 = vperm.xlu0 %572, %v68
  %v574 = vpop.permute.xlu0 %573
  %577 = vset.pattern.permute.xlu0 0
  %578 = vperm.xlu0 %577, %v69
  %v579 = vpop.permute.xlu0 %578
  %582 = vset.pattern.permute.xlu0 0
  %583 = vperm.xlu0 %582, %v70
  %v584 = vpop.permute.xlu0 %583
  %v586 = vsub.f32 %v509, %v442
  %v587 = vsub.f32 %v509, %v443
  %v588 = vsub.f32 %v509, %v444
  %v589 = vsub.f32 %v509, %v445
  %v590 = vsub.f32 %v514, %v446
  %v591 = vsub.f32 %v514, %v447
  %v592 = vsub.f32 %v514, %v448
  %v593 = vsub.f32 %v514, %v449
  %v594 = vsub.f32 %v519, %v450
  %v595 = vsub.f32 %v519, %v451
  %v596 = vsub.f32 %v519, %v452
  %v597 = vsub.f32 %v519, %v453
  %v598 = vsub.f32 %v524, %v454
  %v599 = vsub.f32 %v524, %v455
  %v600 = vsub.f32 %v524, %v456
  %v601 = vsub.f32 %v524, %v457
  %v602 = vsub.f32 %v529, %v458
  %v603 = vsub.f32 %v529, %v459
  %v604 = vsub.f32 %v529, %v460
  %v605 = vsub.f32 %v529, %v461
  %v606 = vsub.f32 %v534, %v462
  %v607 = vsub.f32 %v534, %v463
  %v608 = vsub.f32 %v534, %v464
  %v609 = vsub.f32 %v534, %v465
  %v610 = vsub.f32 %v539, %v466
  %v611 = vsub.f32 %v539, %v467
  %v612 = vsub.f32 %v539, %v468
  %v613 = vsub.f32 %v539, %v469
  %v614 = vsub.f32 %v544, %v470
  %v615 = vsub.f32 %v544, %v471
  %v616 = vsub.f32 %v544, %v472
  %v617 = vsub.f32 %v544, %v473
  %v618 = vsub.f32 %v549, %v474
  %v619 = vsub.f32 %v549, %v475
  %v620 = vsub.f32 %v549, %v476
  %v621 = vsub.f32 %v549, %v477
  %v622 = vsub.f32 %v554, %v478
  %v623 = vsub.f32 %v554, %v479
  %v624 = vsub.f32 %v554, %v480
  %v625 = vsub.f32 %v554, %v481
  %v626 = vsub.f32 %v559, %v482
  %v627 = vsub.f32 %v559, %v483
  %v628 = vsub.f32 %v559, %v484
  %v629 = vsub.f32 %v559, %v485
  %v630 = vsub.f32 %v564, %v486
  %v631 = vsub.f32 %v564, %v487
  %v632 = vsub.f32 %v564, %v488
  %v633 = vsub.f32 %v564, %v489
  %v634 = vsub.f32 %v569, %v490
  %v635 = vsub.f32 %v569, %v491
  %v636 = vsub.f32 %v569, %v492
  %v637 = vsub.f32 %v569, %v493
  %v638 = vsub.f32 %v574, %v494
  %v639 = vsub.f32 %v574, %v495
  %v640 = vsub.f32 %v574, %v496
  %v641 = vsub.f32 %v574, %v497
  %v642 = vsub.f32 %v579, %v498
  %v643 = vsub.f32 %v579, %v499
  %v644 = vsub.f32 %v579, %v500
  %v645 = vsub.f32 %v579, %v501
  %v646 = vsub.f32 %v584, %v502
  %v647 = vsub.f32 %v584, %v503
  %v648 = vsub.f32 %v584, %v504
  %v649 = vsub.f32 %v584, %v505
  %v650 = vmin.f32 %v586, %v590
  %v651 = vmin.f32 %v650, %v594
  %v652 = vmin.f32 %v651, %v598
  %v653 = vmin.f32 %v652, %v602
  %v654 = vmin.f32 %v653, %v606
  %v655 = vmin.f32 %v654, %v610
  %v656 = vmin.f32 %v655, %v614
  %v657 = vmin.f32 %v656, %v618
  %v658 = vmin.f32 %v657, %v622
  %v659 = vmin.f32 %v658, %v626
  %v660 = vmin.f32 %v659, %v630
  %v661 = vmin.f32 %v660, %v634
  %v662 = vmin.f32 %v661, %v638
  %v663 = vmin.f32 %v662, %v642
  %v664 = vmin.f32 %v663, %v646
  %v665 = vrot.slane %v664, 4
  %v666 = vmin.f32 %v664, %v665
  %v667 = vrot.slane %v666, 2
  %v668 = vmin.f32 %v666, %v667
  %v669 = vrot.slane %v668, 1
  %v670 = vmin.f32 %v668, %v669
  %v671 = vmin.f32 %v587, %v591
  %v672 = vmin.f32 %v671, %v595
  %v673 = vmin.f32 %v672, %v599
  %v674 = vmin.f32 %v673, %v603
  %v675 = vmin.f32 %v674, %v607
  %v676 = vmin.f32 %v675, %v611
  %v677 = vmin.f32 %v676, %v615
  %v678 = vmin.f32 %v677, %v619
  %v679 = vmin.f32 %v678, %v623
  %v680 = vmin.f32 %v679, %v627
  %v681 = vmin.f32 %v680, %v631
  %v682 = vmin.f32 %v681, %v635
  %v683 = vmin.f32 %v682, %v639
  %v684 = vmin.f32 %v683, %v643
  %v685 = vmin.f32 %v684, %v647
  %v686 = vrot.slane %v685, 4
  %v687 = vmin.f32 %v685, %v686
  %v688 = vrot.slane %v687, 2
  %v689 = vmin.f32 %v687, %v688
  %v690 = vrot.slane %v689, 1
  %v691 = vmin.f32 %v689, %v690
  %v692 = vmin.f32 %v588, %v592
  %v693 = vmin.f32 %v692, %v596
  %v694 = vmin.f32 %v693, %v600
  %v695 = vmin.f32 %v694, %v604
  %v696 = vmin.f32 %v695, %v608
  %v697 = vmin.f32 %v696, %v612
  %v698 = vmin.f32 %v697, %v616
  %v699 = vmin.f32 %v698, %v620
  %v700 = vmin.f32 %v699, %v624
  %v701 = vmin.f32 %v700, %v628
  %v702 = vmin.f32 %v701, %v632
  %v703 = vmin.f32 %v702, %v636
  %v704 = vmin.f32 %v703, %v640
  %v705 = vmin.f32 %v704, %v644
  %v706 = vmin.f32 %v705, %v648
  %v707 = vrot.slane %v706, 4
  %v708 = vmin.f32 %v706, %v707
  %v709 = vrot.slane %v708, 2
  %v710 = vmin.f32 %v708, %v709
  %v711 = vrot.slane %v710, 1
  %v712 = vmin.f32 %v710, %v711
  %v713 = vmin.f32 %v589, %v593
  %v714 = vmin.f32 %v713, %v597
  %v715 = vmin.f32 %v714, %v601
  %v716 = vmin.f32 %v715, %v605
  %v717 = vmin.f32 %v716, %v609
  %v718 = vmin.f32 %v717, %v613
  %v719 = vmin.f32 %v718, %v617
  %v720 = vmin.f32 %v719, %v621
  %v721 = vmin.f32 %v720, %v625
  %v722 = vmin.f32 %v721, %v629
  %v723 = vmin.f32 %v722, %v633
  %v724 = vmin.f32 %v723, %v637
  %v725 = vmin.f32 %v724, %v641
  %v726 = vmin.f32 %v725, %v645
  %v727 = vmin.f32 %v726, %v649
  %v728 = vrot.slane %v727, 4
  %v729 = vmin.f32 %v727, %v728
  %v730 = vrot.slane %v729, 2
  %v731 = vmin.f32 %v729, %v730
  %v732 = vrot.slane %v731, 1
  %v733 = vmin.f32 %v731, %v732
  %v734 = vlaneseq
  %v735 = vshrl.u32 %v734, 7
  %v736 = vadd.s32 %v735, 8
  %v737 = vadd.s32 %v735, 16
  %v738 = vadd.s32 %v735, 24
  %v739 = vadd.s32 %v735, 32
  %v740 = vadd.s32 %v735, 40
  %v741 = vadd.s32 %v735, 48
  %v742 = vadd.s32 %v735, 56
  %v743 = vadd.s32 %v735, 64
  %v744 = vadd.s32 %v735, 72
  %v745 = vadd.s32 %v735, 80
  %v746 = vadd.s32 %v735, 88
  %v747 = vadd.s32 %v735, 96
  %v748 = vadd.s32 %v735, 104
  %v749 = vadd.s32 %v735, 112
  %v750 = vadd.s32 %v735, 120
  %vm751 = vcmp.eq.f32.partialorder %v586, %v670
  %vm752 = vcmp.eq.f32.partialorder %v587, %v691
  %vm753 = vcmp.eq.f32.partialorder %v588, %v712
  %vm754 = vcmp.eq.f32.partialorder %v589, %v733
  %vm755 = vcmp.eq.f32.partialorder %v590, %v670
  %vm756 = vcmp.eq.f32.partialorder %v591, %v691
  %vm757 = vcmp.eq.f32.partialorder %v592, %v712
  %vm758 = vcmp.eq.f32.partialorder %v593, %v733
  %vm759 = vcmp.eq.f32.partialorder %v594, %v670
  %vm760 = vcmp.eq.f32.partialorder %v595, %v691
  %vm761 = vcmp.eq.f32.partialorder %v596, %v712
  %vm762 = vcmp.eq.f32.partialorder %v597, %v733
  %vm763 = vcmp.eq.f32.partialorder %v598, %v670
  %vm764 = vcmp.eq.f32.partialorder %v599, %v691
  %vm765 = vcmp.eq.f32.partialorder %v600, %v712
  %vm766 = vcmp.eq.f32.partialorder %v601, %v733
  %vm767 = vcmp.eq.f32.partialorder %v602, %v670
  %vm768 = vcmp.eq.f32.partialorder %v603, %v691
  %vm769 = vcmp.eq.f32.partialorder %v604, %v712
  %vm770 = vcmp.eq.f32.partialorder %v605, %v733
  %vm771 = vcmp.eq.f32.partialorder %v606, %v670
  %vm772 = vcmp.eq.f32.partialorder %v607, %v691
  %vm773 = vcmp.eq.f32.partialorder %v608, %v712
  %vm774 = vcmp.eq.f32.partialorder %v609, %v733
  %vm775 = vcmp.eq.f32.partialorder %v610, %v670
  %vm776 = vcmp.eq.f32.partialorder %v611, %v691
  %vm777 = vcmp.eq.f32.partialorder %v612, %v712
  %vm778 = vcmp.eq.f32.partialorder %v613, %v733
  %vm779 = vcmp.eq.f32.partialorder %v614, %v670
  %vm780 = vcmp.eq.f32.partialorder %v615, %v691
  %vm781 = vcmp.eq.f32.partialorder %v616, %v712
  %vm782 = vcmp.eq.f32.partialorder %v617, %v733
  %vm783 = vcmp.eq.f32.partialorder %v618, %v670
  %vm784 = vcmp.eq.f32.partialorder %v619, %v691
  %vm785 = vcmp.eq.f32.partialorder %v620, %v712
  %vm786 = vcmp.eq.f32.partialorder %v621, %v733
  %vm787 = vcmp.eq.f32.partialorder %v622, %v670
  %vm788 = vcmp.eq.f32.partialorder %v623, %v691
  %vm789 = vcmp.eq.f32.partialorder %v624, %v712
  %vm790 = vcmp.eq.f32.partialorder %v625, %v733
  %vm791 = vcmp.eq.f32.partialorder %v626, %v670
  %vm792 = vcmp.eq.f32.partialorder %v627, %v691
  %vm793 = vcmp.eq.f32.partialorder %v628, %v712
  %vm794 = vcmp.eq.f32.partialorder %v629, %v733
  %vm795 = vcmp.eq.f32.partialorder %v630, %v670
  %vm796 = vcmp.eq.f32.partialorder %v631, %v691
  %vm797 = vcmp.eq.f32.partialorder %v632, %v712
  %vm798 = vcmp.eq.f32.partialorder %v633, %v733
  %vm799 = vcmp.eq.f32.partialorder %v634, %v670
  %vm800 = vcmp.eq.f32.partialorder %v635, %v691
  %vm801 = vcmp.eq.f32.partialorder %v636, %v712
  %vm802 = vcmp.eq.f32.partialorder %v637, %v733
  %vm803 = vcmp.eq.f32.partialorder %v638, %v670
  %vm804 = vcmp.eq.f32.partialorder %v639, %v691
  %vm805 = vcmp.eq.f32.partialorder %v640, %v712
  %vm806 = vcmp.eq.f32.partialorder %v641, %v733
  %vm807 = vcmp.eq.f32.partialorder %v642, %v670
  %vm808 = vcmp.eq.f32.partialorder %v643, %v691
  %vm809 = vcmp.eq.f32.partialorder %v644, %v712
  %vm810 = vcmp.eq.f32.partialorder %v645, %v733
  %vm811 = vcmp.eq.f32.partialorder %v646, %v670
  %vm812 = vcmp.eq.f32.partialorder %v647, %v691
  %vm813 = vcmp.eq.f32.partialorder %v648, %v712
  %vm814 = vcmp.eq.f32.partialorder %v649, %v733
  %v815 = vsel %vm751, %v735, 128
  %v816 = vsel %vm752, %v735, 128
  %v817 = vsel %vm753, %v735, 128
  %v818 = vsel %vm754, %v735, 128
  %v819 = vsel %vm755, %v736, 128
  %v820 = vsel %vm756, %v736, 128
  %v821 = vsel %vm757, %v736, 128
  %v822 = vsel %vm758, %v736, 128
  %v823 = vsel %vm759, %v737, 128
  %v824 = vsel %vm760, %v737, 128
  %v825 = vsel %vm761, %v737, 128
  %v826 = vsel %vm762, %v737, 128
  %v827 = vsel %vm763, %v738, 128
  %v828 = vsel %vm764, %v738, 128
  %v829 = vsel %vm765, %v738, 128
  %v830 = vsel %vm766, %v738, 128
  %v831 = vsel %vm767, %v739, 128
  %v832 = vsel %vm768, %v739, 128
  %v833 = vsel %vm769, %v739, 128
  %v834 = vsel %vm770, %v739, 128
  %v835 = vsel %vm771, %v740, 128
  %v836 = vsel %vm772, %v740, 128
  %v837 = vsel %vm773, %v740, 128
  %v838 = vsel %vm774, %v740, 128
  %v839 = vsel %vm775, %v741, 128
  %v840 = vsel %vm776, %v741, 128
  %v841 = vsel %vm777, %v741, 128
  %v842 = vsel %vm778, %v741, 128
  %v843 = vsel %vm779, %v742, 128
  %v844 = vsel %vm780, %v742, 128
  %v845 = vsel %vm781, %v742, 128
  %v846 = vsel %vm782, %v742, 128
  %v847 = vsel %vm783, %v743, 128
  %v848 = vsel %vm784, %v743, 128
  %v849 = vsel %vm785, %v743, 128
  %v850 = vsel %vm786, %v743, 128
  %v851 = vsel %vm787, %v744, 128
  %v852 = vsel %vm788, %v744, 128
  %v853 = vsel %vm789, %v744, 128
  %v854 = vsel %vm790, %v744, 128
  %v855 = vsel %vm791, %v745, 128
  %v856 = vsel %vm792, %v745, 128
  %v857 = vsel %vm793, %v745, 128
  %v858 = vsel %vm794, %v745, 128
  %v859 = vsel %vm795, %v746, 128
  %v860 = vsel %vm796, %v746, 128
  %v861 = vsel %vm797, %v746, 128
  %v862 = vsel %vm798, %v746, 128
  %v863 = vsel %vm799, %v747, 128
  %v864 = vsel %vm800, %v747, 128
  %v865 = vsel %vm801, %v747, 128
  %v866 = vsel %vm802, %v747, 128
  %v867 = vsel %vm803, %v748, 128
  %v868 = vsel %vm804, %v748, 128
  %v869 = vsel %vm805, %v748, 128
  %v870 = vsel %vm806, %v748, 128
  %v871 = vsel %vm807, %v749, 128
  %v872 = vsel %vm808, %v749, 128
  %v873 = vsel %vm809, %v749, 128
  %v874 = vsel %vm810, %v749, 128
  %v875 = vsel %vm811, %v750, 128
  %v876 = vsel %vm812, %v750, 128
  %v877 = vsel %vm813, %v750, 128
  %v878 = vsel %vm814, %v750, 128
  %vm879 = vcmp.lt.s32.totalorder %v815, %v819
  %v880 = vsel %vm879, %v815, %v819
  %vm881 = vcmp.lt.s32.totalorder %v880, %v823
  %v882 = vsel %vm881, %v880, %v823
  %vm883 = vcmp.lt.s32.totalorder %v882, %v827
  %v884 = vsel %vm883, %v882, %v827
  %vm885 = vcmp.lt.s32.totalorder %v884, %v831
  %v886 = vsel %vm885, %v884, %v831
  %vm887 = vcmp.lt.s32.totalorder %v886, %v835
  %v888 = vsel %vm887, %v886, %v835
  %vm889 = vcmp.lt.s32.totalorder %v888, %v839
  %v890 = vsel %vm889, %v888, %v839
  %vm891 = vcmp.lt.s32.totalorder %v890, %v843
  %v892 = vsel %vm891, %v890, %v843
  %vm893 = vcmp.lt.s32.totalorder %v892, %v847
  %v894 = vsel %vm893, %v892, %v847
  %vm895 = vcmp.lt.s32.totalorder %v894, %v851
  %v896 = vsel %vm895, %v894, %v851
  %vm897 = vcmp.lt.s32.totalorder %v896, %v855
  %v898 = vsel %vm897, %v896, %v855
  %vm899 = vcmp.lt.s32.totalorder %v898, %v859
  %v900 = vsel %vm899, %v898, %v859
  %vm901 = vcmp.lt.s32.totalorder %v900, %v863
  %v902 = vsel %vm901, %v900, %v863
  %vm903 = vcmp.lt.s32.totalorder %v902, %v867
  %v904 = vsel %vm903, %v902, %v867
  %vm905 = vcmp.lt.s32.totalorder %v904, %v871
  %v906 = vsel %vm905, %v904, %v871
  %vm907 = vcmp.lt.s32.totalorder %v906, %v875
  %v908 = vsel %vm907, %v906, %v875
  %v909 = vrot.slane %v908, 4
  %vm910 = vcmp.lt.s32.totalorder %v908, %v909
  %v911 = vsel %vm910, %v908, %v909
  %v912 = vrot.slane %v911, 2
  %vm913 = vcmp.lt.s32.totalorder %v911, %v912
  %v914 = vsel %vm913, %v911, %v912
  %v915 = vrot.slane %v914, 1
  %vm916 = vcmp.lt.s32.totalorder %v914, %v915
  %v917 = vsel %vm916, %v914, %v915
  %vm918 = vcmp.lt.s32.totalorder %v816, %v820
  %v919 = vsel %vm918, %v816, %v820
  %vm920 = vcmp.lt.s32.totalorder %v919, %v824
  %v921 = vsel %vm920, %v919, %v824
  %vm922 = vcmp.lt.s32.totalorder %v921, %v828
  %v923 = vsel %vm922, %v921, %v828
  %vm924 = vcmp.lt.s32.totalorder %v923, %v832
  %v925 = vsel %vm924, %v923, %v832
  %vm926 = vcmp.lt.s32.totalorder %v925, %v836
  %v927 = vsel %vm926, %v925, %v836
  %vm928 = vcmp.lt.s32.totalorder %v927, %v840
  %v929 = vsel %vm928, %v927, %v840
  %vm930 = vcmp.lt.s32.totalorder %v929, %v844
  %v931 = vsel %vm930, %v929, %v844
  %vm932 = vcmp.lt.s32.totalorder %v931, %v848
  %v933 = vsel %vm932, %v931, %v848
  %vm934 = vcmp.lt.s32.totalorder %v933, %v852
  %v935 = vsel %vm934, %v933, %v852
  %vm936 = vcmp.lt.s32.totalorder %v935, %v856
  %v937 = vsel %vm936, %v935, %v856
  %vm938 = vcmp.lt.s32.totalorder %v937, %v860
  %v939 = vsel %vm938, %v937, %v860
  %vm940 = vcmp.lt.s32.totalorder %v939, %v864
  %v941 = vsel %vm940, %v939, %v864
  %vm942 = vcmp.lt.s32.totalorder %v941, %v868
  %v943 = vsel %vm942, %v941, %v868
  %vm944 = vcmp.lt.s32.totalorder %v943, %v872
  %v945 = vsel %vm944, %v943, %v872
  %vm946 = vcmp.lt.s32.totalorder %v945, %v876
  %v947 = vsel %vm946, %v945, %v876
  %v948 = vrot.slane %v947, 4
  %vm949 = vcmp.lt.s32.totalorder %v947, %v948
  %v950 = vsel %vm949, %v947, %v948
  %v951 = vrot.slane %v950, 2
  %vm952 = vcmp.lt.s32.totalorder %v950, %v951
  %v953 = vsel %vm952, %v950, %v951
  %v954 = vrot.slane %v953, 1
  %vm955 = vcmp.lt.s32.totalorder %v953, %v954
  %v956 = vsel %vm955, %v953, %v954
  %vm957 = vcmp.lt.s32.totalorder %v817, %v821
  %v958 = vsel %vm957, %v817, %v821
  %vm959 = vcmp.lt.s32.totalorder %v958, %v825
  %v960 = vsel %vm959, %v958, %v825
  %vm961 = vcmp.lt.s32.totalorder %v960, %v829
  %v962 = vsel %vm961, %v960, %v829
  %vm963 = vcmp.lt.s32.totalorder %v962, %v833
  %v964 = vsel %vm963, %v962, %v833
  %vm965 = vcmp.lt.s32.totalorder %v964, %v837
  %v966 = vsel %vm965, %v964, %v837
  %vm967 = vcmp.lt.s32.totalorder %v966, %v841
  %v968 = vsel %vm967, %v966, %v841
  %vm969 = vcmp.lt.s32.totalorder %v968, %v845
  %v970 = vsel %vm969, %v968, %v845
  %vm971 = vcmp.lt.s32.totalorder %v970, %v849
  %v972 = vsel %vm971, %v970, %v849
  %vm973 = vcmp.lt.s32.totalorder %v972, %v853
  %v974 = vsel %vm973, %v972, %v853
  %vm975 = vcmp.lt.s32.totalorder %v974, %v857
  %v976 = vsel %vm975, %v974, %v857
  %vm977 = vcmp.lt.s32.totalorder %v976, %v861
  %v978 = vsel %vm977, %v976, %v861
  %vm979 = vcmp.lt.s32.totalorder %v978, %v865
  %v980 = vsel %vm979, %v978, %v865
  %vm981 = vcmp.lt.s32.totalorder %v980, %v869
  %v982 = vsel %vm981, %v980, %v869
  %vm983 = vcmp.lt.s32.totalorder %v982, %v873
  %v984 = vsel %vm983, %v982, %v873
  %vm985 = vcmp.lt.s32.totalorder %v984, %v877
  %v986 = vsel %vm985, %v984, %v877
  %v987 = vrot.slane %v986, 4
  %vm988 = vcmp.lt.s32.totalorder %v986, %v987
  %v989 = vsel %vm988, %v986, %v987
  %v990 = vrot.slane %v989, 2
  %vm991 = vcmp.lt.s32.totalorder %v989, %v990
  %v992 = vsel %vm991, %v989, %v990
  %v993 = vrot.slane %v992, 1
  %vm994 = vcmp.lt.s32.totalorder %v992, %v993
  %v995 = vsel %vm994, %v992, %v993
  %vm996 = vcmp.lt.s32.totalorder %v818, %v822
  %v997 = vsel %vm996, %v818, %v822
  %vm998 = vcmp.lt.s32.totalorder %v997, %v826
  %v999 = vsel %vm998, %v997, %v826
  %vm1000 = vcmp.lt.s32.totalorder %v999, %v830
  %v1001 = vsel %vm1000, %v999, %v830
  %vm1002 = vcmp.lt.s32.totalorder %v1001, %v834
  %v1003 = vsel %vm1002, %v1001, %v834
  %vm1004 = vcmp.lt.s32.totalorder %v1003, %v838
  %v1005 = vsel %vm1004, %v1003, %v838
  %vm1006 = vcmp.lt.s32.totalorder %v1005, %v842
  %v1007 = vsel %vm1006, %v1005, %v842
  %vm1008 = vcmp.lt.s32.totalorder %v1007, %v846
  %v1009 = vsel %vm1008, %v1007, %v846
  %vm1010 = vcmp.lt.s32.totalorder %v1009, %v850
  %v1011 = vsel %vm1010, %v1009, %v850
  %vm1012 = vcmp.lt.s32.totalorder %v1011, %v854
  %v1013 = vsel %vm1012, %v1011, %v854
  %vm1014 = vcmp.lt.s32.totalorder %v1013, %v858
  %v1015 = vsel %vm1014, %v1013, %v858
  %vm1016 = vcmp.lt.s32.totalorder %v1015, %v862
  %v1017 = vsel %vm1016, %v1015, %v862
  %vm1018 = vcmp.lt.s32.totalorder %v1017, %v866
  %v1019 = vsel %vm1018, %v1017, %v866
  %vm1020 = vcmp.lt.s32.totalorder %v1019, %v870
  %v1021 = vsel %vm1020, %v1019, %v870
  %vm1022 = vcmp.lt.s32.totalorder %v1021, %v874
  %v1023 = vsel %vm1022, %v1021, %v874
  %vm1024 = vcmp.lt.s32.totalorder %v1023, %v878
  %v1025 = vsel %vm1024, %v1023, %v878
  %v1026 = vrot.slane %v1025, 4
  %vm1027 = vcmp.lt.s32.totalorder %v1025, %v1026
  %v1028 = vsel %vm1027, %v1025, %v1026
  %v1029 = vrot.slane %v1028, 2
  %vm1030 = vcmp.lt.s32.totalorder %v1028, %v1029
  %v1031 = vsel %vm1030, %v1028, %v1029
  %v1032 = vrot.slane %v1031, 1
  %vm1033 = vcmp.lt.s32.totalorder %v1031, %v1032
  %v1034 = vsel %vm1033, %v1031, %v1032
  %vm1035 = vcmp.eq.s32.totalorder %v735, %v917
  %vm1036 = vcmp.eq.s32.totalorder %v735, %v956
  %vm1037 = vcmp.eq.s32.totalorder %v735, %v995
  %vm1038 = vcmp.eq.s32.totalorder %v735, %v1034
  %vm1039 = vcmp.eq.s32.totalorder %v736, %v917
  %vm1040 = vcmp.eq.s32.totalorder %v736, %v956
  %vm1041 = vcmp.eq.s32.totalorder %v736, %v995
  %vm1042 = vcmp.eq.s32.totalorder %v736, %v1034
  %vm1043 = vcmp.eq.s32.totalorder %v737, %v917
  %vm1044 = vcmp.eq.s32.totalorder %v737, %v956
  %vm1045 = vcmp.eq.s32.totalorder %v737, %v995
  %vm1046 = vcmp.eq.s32.totalorder %v737, %v1034
  %vm1047 = vcmp.eq.s32.totalorder %v738, %v917
  %vm1048 = vcmp.eq.s32.totalorder %v738, %v956
  %vm1049 = vcmp.eq.s32.totalorder %v738, %v995
  %vm1050 = vcmp.eq.s32.totalorder %v738, %v1034
  %vm1051 = vcmp.eq.s32.totalorder %v739, %v917
  %vm1052 = vcmp.eq.s32.totalorder %v739, %v956
  %vm1053 = vcmp.eq.s32.totalorder %v739, %v995
  %vm1054 = vcmp.eq.s32.totalorder %v739, %v1034
  %vm1055 = vcmp.eq.s32.totalorder %v740, %v917
  %vm1056 = vcmp.eq.s32.totalorder %v740, %v956
  %vm1057 = vcmp.eq.s32.totalorder %v740, %v995
  %vm1058 = vcmp.eq.s32.totalorder %v740, %v1034
  %vm1059 = vcmp.eq.s32.totalorder %v741, %v917
  %vm1060 = vcmp.eq.s32.totalorder %v741, %v956
  %vm1061 = vcmp.eq.s32.totalorder %v741, %v995
  %vm1062 = vcmp.eq.s32.totalorder %v741, %v1034
  %vm1063 = vcmp.eq.s32.totalorder %v742, %v917
  %vm1064 = vcmp.eq.s32.totalorder %v742, %v956
  %vm1065 = vcmp.eq.s32.totalorder %v742, %v995
  %vm1066 = vcmp.eq.s32.totalorder %v742, %v1034
  %vm1067 = vcmp.eq.s32.totalorder %v743, %v917
  %vm1068 = vcmp.eq.s32.totalorder %v743, %v956
  %vm1069 = vcmp.eq.s32.totalorder %v743, %v995
  %vm1070 = vcmp.eq.s32.totalorder %v743, %v1034
  %vm1071 = vcmp.eq.s32.totalorder %v744, %v917
  %vm1072 = vcmp.eq.s32.totalorder %v744, %v956
  %vm1073 = vcmp.eq.s32.totalorder %v744, %v995
  %vm1074 = vcmp.eq.s32.totalorder %v744, %v1034
  %vm1075 = vcmp.eq.s32.totalorder %v745, %v917
  %vm1076 = vcmp.eq.s32.totalorder %v745, %v956
  %vm1077 = vcmp.eq.s32.totalorder %v745, %v995
  %vm1078 = vcmp.eq.s32.totalorder %v745, %v1034
  %vm1079 = vcmp.eq.s32.totalorder %v746, %v917
  %vm1080 = vcmp.eq.s32.totalorder %v746, %v956
  %vm1081 = vcmp.eq.s32.totalorder %v746, %v995
  %vm1082 = vcmp.eq.s32.totalorder %v746, %v1034
  %vm1083 = vcmp.eq.s32.totalorder %v747, %v917
  %vm1084 = vcmp.eq.s32.totalorder %v747, %v956
  %vm1085 = vcmp.eq.s32.totalorder %v747, %v995
  %vm1086 = vcmp.eq.s32.totalorder %v747, %v1034
  %vm1087 = vcmp.eq.s32.totalorder %v748, %v917
  %vm1088 = vcmp.eq.s32.totalorder %v748, %v956
  %vm1089 = vcmp.eq.s32.totalorder %v748, %v995
  %vm1090 = vcmp.eq.s32.totalorder %v748, %v1034
  %vm1091 = vcmp.eq.s32.totalorder %v749, %v917
  %vm1092 = vcmp.eq.s32.totalorder %v749, %v956
  %vm1093 = vcmp.eq.s32.totalorder %v749, %v995
  %vm1094 = vcmp.eq.s32.totalorder %v749, %v1034
  %vm1095 = vcmp.eq.s32.totalorder %v750, %v917
  %vm1096 = vcmp.eq.s32.totalorder %v750, %v956
  %vm1097 = vcmp.eq.s32.totalorder %v750, %v995
  %vm1098 = vcmp.eq.s32.totalorder %v750, %v1034
  %v1099 = vsel %vm1035, 1, 0
  %v1100 = vsel %vm1036, 1, 0
  %v1101 = vsel %vm1037, 1, 0
  %v1102 = vsel %vm1038, 1, 0
  %v1103 = vsel %vm1039, 1, 0
  %v1104 = vsel %vm1040, 1, 0
  %v1105 = vsel %vm1041, 1, 0
  %v1106 = vsel %vm1042, 1, 0
  %v1107 = vsel %vm1043, 1, 0
  %v1108 = vsel %vm1044, 1, 0
  %v1109 = vsel %vm1045, 1, 0
  %v1110 = vsel %vm1046, 1, 0
  %v1111 = vsel %vm1047, 1, 0
  %v1112 = vsel %vm1048, 1, 0
  %v1113 = vsel %vm1049, 1, 0
  %v1114 = vsel %vm1050, 1, 0
  %v1115 = vsel %vm1051, 1, 0
  %v1116 = vsel %vm1052, 1, 0
  %v1117 = vsel %vm1053, 1, 0
  %v1118 = vsel %vm1054, 1, 0
  %v1119 = vsel %vm1055, 1, 0
  %v1120 = vsel %vm1056, 1, 0
  %v1121 = vsel %vm1057, 1, 0
  %v1122 = vsel %vm1058, 1, 0
  %v1123 = vsel %vm1059, 1, 0
  %v1124 = vsel %vm1060, 1, 0
  %v1125 = vsel %vm1061, 1, 0
  %v1126 = vsel %vm1062, 1, 0
  %v1127 = vsel %vm1063, 1, 0
  %v1128 = vsel %vm1064, 1, 0
  %v1129 = vsel %vm1065, 1, 0
  %v1130 = vsel %vm1066, 1, 0
  %v1131 = vsel %vm1067, 1, 0
  %v1132 = vsel %vm1068, 1, 0
  %v1133 = vsel %vm1069, 1, 0
  %v1134 = vsel %vm1070, 1, 0
  %v1135 = vsel %vm1071, 1, 0
  %v1136 = vsel %vm1072, 1, 0
  %v1137 = vsel %vm1073, 1, 0
  %v1138 = vsel %vm1074, 1, 0
  %v1139 = vsel %vm1075, 1, 0
  %v1140 = vsel %vm1076, 1, 0
  %v1141 = vsel %vm1077, 1, 0
  %v1142 = vsel %vm1078, 1, 0
  %v1143 = vsel %vm1079, 1, 0
  %v1144 = vsel %vm1080, 1, 0
  %v1145 = vsel %vm1081, 1, 0
  %v1146 = vsel %vm1082, 1, 0
  %v1147 = vsel %vm1083, 1, 0
  %v1148 = vsel %vm1084, 1, 0
  %v1149 = vsel %vm1085, 1, 0
  %v1150 = vsel %vm1086, 1, 0
  %v1151 = vsel %vm1087, 1, 0
  %v1152 = vsel %vm1088, 1, 0
  %v1153 = vsel %vm1089, 1, 0
  %v1154 = vsel %vm1090, 1, 0
  %v1155 = vsel %vm1091, 1, 0
  %v1156 = vsel %vm1092, 1, 0
  %v1157 = vsel %vm1093, 1, 0
  %v1158 = vsel %vm1094, 1, 0
  %v1159 = vsel %vm1095, 1, 0
  %v1160 = vsel %vm1096, 1, 0
  %v1161 = vsel %vm1097, 1, 0
  %v1162 = vsel %vm1098, 1, 0
  %v1163 = vcvt.s32.f32 %v1099
  %v1164 = vcvt.s32.f32 %v1100
  %v1165 = vcvt.s32.f32 %v1101
  %v1166 = vcvt.s32.f32 %v1102
  %v1167 = vcvt.s32.f32 %v1103
  %v1168 = vcvt.s32.f32 %v1104
  %v1169 = vcvt.s32.f32 %v1105
  %v1170 = vcvt.s32.f32 %v1106
  %v1171 = vcvt.s32.f32 %v1107
  %v1172 = vcvt.s32.f32 %v1108
  %v1173 = vcvt.s32.f32 %v1109
  %v1174 = vcvt.s32.f32 %v1110
  %v1175 = vcvt.s32.f32 %v1111
  %v1176 = vcvt.s32.f32 %v1112
  %v1177 = vcvt.s32.f32 %v1113
  %v1178 = vcvt.s32.f32 %v1114
  %v1179 = vcvt.s32.f32 %v1115
  %v1180 = vcvt.s32.f32 %v1116
  %v1181 = vcvt.s32.f32 %v1117
  %v1182 = vcvt.s32.f32 %v1118
  %v1183 = vcvt.s32.f32 %v1119
  %v1184 = vcvt.s32.f32 %v1120
  %v1185 = vcvt.s32.f32 %v1121
  %v1186 = vcvt.s32.f32 %v1122
  %v1187 = vcvt.s32.f32 %v1123
  %v1188 = vcvt.s32.f32 %v1124
  %v1189 = vcvt.s32.f32 %v1125
  %v1190 = vcvt.s32.f32 %v1126
  %v1191 = vcvt.s32.f32 %v1127
  %v1192 = vcvt.s32.f32 %v1128
  %v1193 = vcvt.s32.f32 %v1129
  %v1194 = vcvt.s32.f32 %v1130
  %v1195 = vcvt.s32.f32 %v1131
  %v1196 = vcvt.s32.f32 %v1132
  %v1197 = vcvt.s32.f32 %v1133
  %v1198 = vcvt.s32.f32 %v1134
  %v1199 = vcvt.s32.f32 %v1135
  %v1200 = vcvt.s32.f32 %v1136
  %v1201 = vcvt.s32.f32 %v1137
  %v1202 = vcvt.s32.f32 %v1138
  %v1203 = vcvt.s32.f32 %v1139
  %v1204 = vcvt.s32.f32 %v1140
  %v1205 = vcvt.s32.f32 %v1141
  %v1206 = vcvt.s32.f32 %v1142
  %v1207 = vcvt.s32.f32 %v1143
  %v1208 = vcvt.s32.f32 %v1144
  %v1209 = vcvt.s32.f32 %v1145
  %v1210 = vcvt.s32.f32 %v1146
  %v1211 = vcvt.s32.f32 %v1147
  %v1212 = vcvt.s32.f32 %v1148
  %v1213 = vcvt.s32.f32 %v1149
  %v1214 = vcvt.s32.f32 %v1150
  %v1215 = vcvt.s32.f32 %v1151
  %v1216 = vcvt.s32.f32 %v1152
  %v1217 = vcvt.s32.f32 %v1153
  %v1218 = vcvt.s32.f32 %v1154
  %v1219 = vcvt.s32.f32 %v1155
  %v1220 = vcvt.s32.f32 %v1156
  %v1221 = vcvt.s32.f32 %v1157
  %v1222 = vcvt.s32.f32 %v1158
  %v1223 = vcvt.s32.f32 %v1159
  %v1224 = vcvt.s32.f32 %v1160
  %v1225 = vcvt.s32.f32 %v1161
  %v1226 = vcvt.s32.f32 %v1162
  %1227 = vmatprep.subr.mxu0 %v1164
  %1228 = vmatpush1.msra.mxu0 %v1163
  %1229 = vmatprep.subr.mxu0 %v1168
  %1230 = vmatpush1.msra.mxu0 %v1167
  %1231 = vmatprep.subr.mxu0 %v1172
  %1232 = vmatpush1.msra.mxu0 %v1171
  %1233 = vmatprep.subr.mxu0 %v1176
  %1234 = vmatpush1.msra.mxu0 %v1175
  %1235 = vmatprep.subr.mxu0 %v1180
  %1236 = vmatpush1.msra.mxu0 %v1179
  %1237 = vmatprep.subr.mxu0 %v1184
  %1238 = vmatpush1.msra.mxu0 %v1183
  %1239 = vmatprep.subr.mxu0 %v1188
  %1240 = vmatpush1.msra.mxu0 %v1187
  %1241 = vmatprep.subr.mxu0 %v1192
  %1242 = vmatpush1.msra.mxu0 %v1191
  %1243 = vmatprep.subr.mxu0 %v1196
  %1244 = vmatpush1.msra.mxu0 %v1195
  %1245 = vmatprep.subr.mxu0 %v1200
  %1246 = vmatpush1.msra.mxu0 %v1199
  %1247 = vmatprep.subr.mxu0 %v1204
  %1248 = vmatpush1.msra.mxu0 %v1203
  %1249 = vmatprep.subr.mxu0 %v1208
  %1250 = vmatpush1.msra.mxu0 %v1207
  %1251 = vmatprep.subr.mxu0 %v1212
  %1252 = vmatpush1.msra.mxu0 %v1211
  %1253 = vmatprep.subr.mxu0 %v1216
  %1254 = vmatpush1.msra.mxu0 %v1215
  %1255 = vmatprep.subr.mxu0 %v1220
  %1256 = vmatpush1.msra.mxu0 %v1219
  %1257 = vmatprep.subr.mxu0 %v1224
  %1258 = vmatpush1.msra.mxu0 %v1223
  %1259 = vmatprep.subr.mxu0 0.0
  %1260 = vmatpush1.msra.mxu0 0.0
  %1261 = vmatprep.subr.mxu0 0.0
  %1262 = vmatpush1.msra.mxu0 0.0
  %1263 = vmatprep.subr.mxu0 0.0
  %1264 = vmatpush1.msra.mxu0 0.0
  %1265 = vmatprep.subr.mxu0 0.0
  %1266 = vmatpush1.msra.mxu0 0.0
  %1267 = vmatprep.subr.mxu0 0.0
  %1268 = vmatpush1.msra.mxu0 0.0
  %1269 = vmatprep.subr.mxu0 0.0
  %1270 = vmatpush1.msra.mxu0 0.0
  %1271 = vmatprep.subr.mxu0 0.0
  %1272 = vmatpush1.msra.mxu0 0.0
  %1273 = vmatprep.subr.mxu0 0.0
  %1274 = vmatpush1.msra.mxu0 0.0
  %1275 = vmatprep.subr.mxu0 0.0
  %1276 = vmatpush1.msra.mxu0 0.0
  %1277 = vmatprep.subr.mxu0 0.0
  %1278 = vmatpush1.msra.mxu0 0.0
  %1279 = vmatprep.subr.mxu0 0.0
  %1280 = vmatpush1.msra.mxu0 0.0
  %1281 = vmatprep.subr.mxu0 0.0
  %1282 = vmatpush1.msra.mxu0 0.0
  %1283 = vmatprep.subr.mxu0 0.0
  %1284 = vmatpush1.msra.mxu0 0.0
  %1285 = vmatprep.subr.mxu0 0.0
  %1286 = vmatpush1.msra.mxu0 0.0
  %1287 = vmatprep.subr.mxu0 0.0
  %1288 = vmatpush1.msra.mxu0 0.0
  %1289 = vmatprep.subr.mxu0 0.0
  %1290 = vmatpush1.msra.mxu0 0.0
  %1291 = vmatprep.mubr.f32.mxu0 0.0
  %1292 = vmatmul.mubr.f32.gmra.mrb[0].mxu0 %v51
  %v1293 = vpop.f32.mrb[0].mxu0
  %v1294 = vadd.f32 0.0, %v1293
  %v1295 = vpop.f32.mrb[0].mxu0
  %v1296 = vadd.f32 0.0, %v1295
  %1297 = vmatprep.mubr.f32.mxu0 0.0
  %1298 = vmatmul.mubr.f32.gmra.mrb[0].mxu0 %v52
  %v1299 = vpop.f32.mrb[0].mxu0
  %v1300 = vadd.f32 0.0, %v1299
  %v1301 = vpop.f32.mrb[0].mxu0
  %v1302 = vadd.f32 0.0, %v1301
  %1303 = vmatprep.mubr.f32.mxu0 0.0
  %1304 = vmatmul.mubr.f32.gmra.mrb[0].mxu0 %v53
  %v1305 = vpop.f32.mrb[0].mxu0
  %v1306 = vadd.f32 0.0, %v1305
  %v1307 = vpop.f32.mrb[0].mxu0
  %v1308 = vadd.f32 0.0, %v1307
  %1309 = vmatprep.mubr.f32.mxu0 0.0
  %1310 = vmatmul.mubr.f32.gmra.mrb[0].mxu0 %v54
  %v1311 = vpop.f32.mrb[0].mxu0
  %v1312 = vadd.f32 0.0, %v1311
  %v1313 = vpop.f32.mrb[0].mxu0
  %v1314 = vadd.f32 0.0, %v1313
  %1315 = vdwg.mxu0
  %1316 = vmatprep.subr.mxu0 %v1166
  %1317 = vmatpush1.msra.mxu0 %v1165
  %1318 = vmatprep.subr.mxu0 %v1170
  %1319 = vmatpush1.msra.mxu0 %v1169
  %1320 = vmatprep.subr.mxu0 %v1174
  %1321 = vmatpush1.msra.mxu0 %v1173
  %1322 = vmatprep.subr.mxu0 %v1178
  %1323 = vmatpush1.msra.mxu0 %v1177
  %1324 = vmatprep.subr.mxu0 %v1182
  %1325 = vmatpush1.msra.mxu0 %v1181
  %1326 = vmatprep.subr.mxu0 %v1186
  %1327 = vmatpush1.msra.mxu0 %v1185
  %1328 = vmatprep.subr.mxu0 %v1190
  %1329 = vmatpush1.msra.mxu0 %v1189
  %1330 = vmatprep.subr.mxu0 %v1194
  %1331 = vmatpush1.msra.mxu0 %v1193
  %1332 = vmatprep.subr.mxu0 %v1198
  %1333 = vmatpush1.msra.mxu0 %v1197
  %1334 = vmatprep.subr.mxu0 %v1202
  %1335 = vmatpush1.msra.mxu0 %v1201
  %1336 = vmatprep.subr.mxu0 %v1206
  %1337 = vmatpush1.msra.mxu0 %v1205
  %1338 = vmatprep.subr.mxu0 %v1210
  %1339 = vmatpush1.msra.mxu0 %v1209
  %1340 = vmatprep.subr.mxu0 %v1214
  %1341 = vmatpush1.msra.mxu0 %v1213
  %1342 = vmatprep.subr.mxu0 %v1218
  %1343 = vmatpush1.msra.mxu0 %v1217
  %1344 = vmatprep.subr.mxu0 %v1222
  %1345 = vmatpush1.msra.mxu0 %v1221
  %1346 = vmatprep.subr.mxu0 %v1226
  %1347 = vmatpush1.msra.mxu0 %v1225
  %1348 = vmatprep.subr.mxu0 0.0
  %1349 = vmatpush1.msra.mxu0 0.0
  %1350 = vmatprep.subr.mxu0 0.0
  %1351 = vmatpush1.msra.mxu0 0.0
  %1352 = vmatprep.subr.mxu0 0.0
  %1353 = vmatpush1.msra.mxu0 0.0
  %1354 = vmatprep.subr.mxu0 0.0
  %1355 = vmatpush1.msra.mxu0 0.0
  %1356 = vmatprep.subr.mxu0 0.0
  %1357 = vmatpush1.msra.mxu0 0.0
  %1358 = vmatprep.subr.mxu0 0.0
  %1359 = vmatpush1.msra.mxu0 0.0
  %1360 = vmatprep.subr.mxu0 0.0
  %1361 = vmatpush1.msra.mxu0 0.0
  %1362 = vmatprep.subr.mxu0 0.0
  %1363 = vmatpush1.msra.mxu0 0.0
  %1364 = vmatprep.subr.mxu0 0.0
  %1365 = vmatpush1.msra.mxu0 0.0
  %1366 = vmatprep.subr.mxu0 0.0
  %1367 = vmatpush1.msra.mxu0 0.0
  %1368 = vmatprep.subr.mxu0 0.0
  %1369 = vmatpush1.msra.mxu0 0.0
  %1370 = vmatprep.subr.mxu0 0.0
  %1371 = vmatpush1.msra.mxu0 0.0
  %1372 = vmatprep.subr.mxu0 0.0
  %1373 = vmatpush1.msra.mxu0 0.0
  %1374 = vmatprep.subr.mxu0 0.0
  %1375 = vmatpush1.msra.mxu0 0.0
  %1376 = vmatprep.subr.mxu0 0.0
  %1377 = vmatpush1.msra.mxu0 0.0
  %1378 = vmatprep.subr.mxu0 0.0
  %1379 = vmatpush1.msra.mxu0 0.0
  %1380 = vmatprep.mubr.f32.mxu0 0.0
  %1381 = vmatmul.mubr.f32.gmra.mrb[0].mxu0 %v51
  %v1382 = vpop.f32.mrb[0].mxu0
  %v1383 = vadd.f32 0.0, %v1382
  %v1384 = vpop.f32.mrb[0].mxu0
  %v1385 = vadd.f32 0.0, %v1384
  %1386 = vmatprep.mubr.f32.mxu0 0.0
  %1387 = vmatmul.mubr.f32.gmra.mrb[0].mxu0 %v52
  %v1388 = vpop.f32.mrb[0].mxu0
  %v1389 = vadd.f32 0.0, %v1388
  %v1390 = vpop.f32.mrb[0].mxu0
  %v1391 = vadd.f32 0.0, %v1390
  %1392 = vmatprep.mubr.f32.mxu0 0.0
  %1393 = vmatmul.mubr.f32.gmra.mrb[0].mxu0 %v53
  %v1394 = vpop.f32.mrb[0].mxu0
  %v1395 = vadd.f32 0.0, %v1394
  %v1396 = vpop.f32.mrb[0].mxu0
  %v1397 = vadd.f32 0.0, %v1396
  %1398 = vmatprep.mubr.f32.mxu0 0.0
  %1399 = vmatmul.mubr.f32.gmra.mrb[0].mxu0 %v54
  %v1400 = vpop.f32.mrb[0].mxu0
  %v1401 = vadd.f32 0.0, %v1400
  %v1402 = vpop.f32.mrb[0].mxu0
  %v1403 = vadd.f32 0.0, %v1402
  %1404 = vdwg.mxu0
  %1405 = vst [vmem:[%s4] sm:$0xff] %v1294
  %1406 = vst [vmem:[%s4 + $0x8] sm:$0xff] %v1296
  %1407 = vst [vmem:[%s4 + $0x10] sm:$0xff] %v1383
  %1408 = vst [vmem:[%s4 + $0x18] sm:$0xff] %v1385
  %1409 = vst [vmem:[%s4 + $0x20] sm:$0xff] %v1300
  %1410 = vst [vmem:[%s4 + $0x28] sm:$0xff] %v1302
  %1411 = vst [vmem:[%s4 + $0x30] sm:$0xff] %v1389
  %1412 = vst [vmem:[%s4 + $0x38] sm:$0xff] %v1391
  %1413 = vst [vmem:[%s4 + $0x40] sm:$0xff] %v1306
  %1414 = vst [vmem:[%s4 + $0x48] sm:$0xff] %v1308
  %1415 = vst [vmem:[%s4 + $0x50] sm:$0xff] %v1395
  %1416 = vst [vmem:[%s4 + $0x58] sm:$0xff] %v1397
  %1417 = vst [vmem:[%s4 + $0x60] sm:$0xff] %v1312
  %1418 = vst [vmem:[%s4 + $0x68] sm:$0xff] %v1314
  %1419 = vst [vmem:[%s4 + $0x70] sm:$0xff] %v1401
  %1420 = vst [vmem:[%s4 + $0x78] sm:$0xff] %v1403
  %v1421 = vsub.f32 %v19, %v1294
  %v1422 = vsub.f32 %v20, %v1296
  %v1423 = vsub.f32 %v21, %v1383
  %v1424 = vsub.f32 %v22, %v1385
  %v1425 = vsub.f32 %v23, %v1300
  %v1426 = vsub.f32 %v24, %v1302
  %v1427 = vsub.f32 %v25, %v1389
  %v1428 = vsub.f32 %v26, %v1391
  %v1429 = vsub.f32 %v27, %v1306
  %v1430 = vsub.f32 %v28, %v1308
  %v1431 = vsub.f32 %v29, %v1395
  %v1432 = vsub.f32 %v30, %v1397
  %v1433 = vsub.f32 %v31, %v1312
  %v1434 = vsub.f32 %v32, %v1314
  %v1435 = vsub.f32 %v33, %v1401
  %v1436 = vsub.f32 %v34, %v1403
  %v1437 = vmul.f32 %v1421, %v1421
  %v1438 = vmul.f32 %v1422, %v1422
  %v1439 = vmul.f32 %v1423, %v1423
  %v1440 = vmul.f32 %v1424, %v1424
  %v1441 = vmul.f32 %v1425, %v1425
  %v1442 = vmul.f32 %v1426, %v1426
  %v1443 = vmul.f32 %v1427, %v1427
  %v1444 = vmul.f32 %v1428, %v1428
  %v1445 = vmul.f32 %v1429, %v1429
  %v1446 = vmul.f32 %v1430, %v1430
  %v1447 = vmul.f32 %v1431, %v1431
  %v1448 = vmul.f32 %v1432, %v1432
  %v1449 = vmul.f32 %v1433, %v1433
  %v1450 = vmul.f32 %v1434, %v1434
  %v1451 = vmul.f32 %v1435, %v1435
  %v1452 = vmul.f32 %v1436, %v1436
  %v1453 = vadd.f32 %v1437, %v1441
  %v1454 = vadd.f32 %v1438, %v1442
  %v1455 = vadd.f32 %v1439, %v1443
  %v1456 = vadd.f32 %v1440, %v1444
  %v1457 = vadd.f32 %v1453, %v1445
  %v1458 = vadd.f32 %v1454, %v1446
  %v1459 = vadd.f32 %v1455, %v1447
  %v1460 = vadd.f32 %v1456, %v1448
  %v1461 = vadd.f32 %v1457, %v1449
  %v1462 = vadd.f32 %v1458, %v1450
  %v1463 = vadd.f32 %v1459, %v1451
  %v1464 = vadd.f32 %v1460, %v1452
  %v1465 = vadd.f32 %v1461, %v1462
  %v1466 = vadd.f32 %v1465, %v1463
  %v1467 = vadd.f32 %v1466, %v1464
  %1468 = vst [vmem:[%s5] sm:$0xff] %v1467
  // Predicated region
  $region18: #{vector_quantizer.1} parent=0 // pred_check
    _
  $region19: #{vector_quantizer.1} parent=0 // pred_check_branch
    %1470 = sbr.rel (0) target = $region21
  $region20: #{vector_quantizer.1} parent=0 // pred_region
    _
  $region21: #{vector_quantizer.1} parent=0 // pred_fallthru
    _
  // Predicated region
  $region22: #{vector_quantizer.1} parent=0 // pred_check
    _
  $region23: #{vector_quantizer.1} parent=0 // pred_check_branch
    %1472 = sbr.rel (0) target = $region25
  $region24: #{vector_quantizer.1} parent=0 // pred_region
    _
  $region25: #{vector_quantizer.1} parent=0 // pred_fallthru
    _
  // Predicated region
  $region26: #{vector_quantizer.1} parent=0 // pred_check
    _
  $region27: #{vector_quantizer.1} parent=0 // pred_check_branch
    %1474 = sbr.rel (0) target = $region29
  $region28: #{vector_quantizer.1} parent=0 // pred_region
    _
  $region29: #{vector_quantizer.1} parent=0 // pred_fallthru
    _
  // Predicated region
  $region30: #{vector_quantizer.1} parent=0 // pred_check
    _
  $region31: #{vector_quantizer.1} parent=0 // pred_check_branch
    %1476 = sbr.rel (0) target = $region33
  $region32: #{vector_quantizer.1} parent=0 // pred_region
    _
  $region33: #{vector_quantizer.1} parent=0 // pred_fallthru
    _

</llo_original>
